<compile_context>
chip_gen: v7x
topology: tpu7x:2x2x1
jax: 0.10.0
libtpu: 0.0.40
codegen_flags: <defaults>
</compile_context>

<pallas_src>
import functools

import jax
import jax.numpy as jnp
from jax import lax
from jax.experimental import pallas as pl
from jax.experimental.pallas import tpu as pltpu


def _round_up(x, m):
    return ((x + m - 1) // m) * m


def _make_kernel(C, tn, sub, dhw):
    """Build the dice/CE accumulation kernel for static tile parameters."""
    n_sub = tn // sub
    needs_mask = (dhw % tn) != 0

    def kernel(x_ref, t_ref, w_ref, dice_ref, ce_ref,
               dnum_ref, osum_ref, tsum_ref, cen_ref, cden_ref):
        # x_ref   : (C, tn)   logits tile (input dtype, cast below)
        # t_ref   : (1, tn)   int32 targets
        # w_ref   : (C, 1)    f32 per-class CE weight (resident)
        # dice_ref: (3, C)    f32 output [dice_num, out_sum, tgt_sum] for this batch
        # ce_ref  : (1, 2)    f32 output [ce_weighted_nll_sum, weight_sum]
        # *_ref (scratch): lane-wise partial-sum accumulators
        pi = pl.program_id(1)

        @pl.when(pi == 0)
        def _():
            dnum_ref[...] = jnp.zeros_like(dnum_ref)
            osum_ref[...] = jnp.zeros_like(osum_ref)
            tsum_ref[...] = jnp.zeros_like(tsum_ref)
            cen_ref[...] = jnp.zeros_like(cen_ref)
            cden_ref[...] = jnp.zeros_like(cden_ref)

        w = w_ref[...].astype(jnp.float32)                         # (C, 1)

        # Hoisted iotas: emitted once, reused by every sub-chunk below
        # (broadcast_in_dim is not CSE'd by JAX).
        cls_ids = lax.broadcasted_iota(jnp.int32, (C, sub), 0)     # (C, sub)
        if needs_mask:
            lane = lax.broadcasted_iota(jnp.int32, (1, sub), 1)    # (1, sub)
            lane_base = pi * tn + lane                             # (1, sub)

        # Walk the tile in fixed sub-chunks (static slices, bounded live ranges).
        for j in range(n_sub):
            lo, hi = j * sub, (j + 1) * sub
            x = x_ref[:, lo:hi].astype(jnp.float32)                # (C, sub)
            t = t_ref[:, lo:hi]                                    # (1, sub)

            mask = (t == cls_ids).astype(jnp.float32)              # (C, sub)

            if needs_mask:
                valid = (lane_base + lo) < dhw                     # (1, sub) bool
                x = jnp.where(valid, x, 0.0)
                mask = jnp.where(valid, mask, 0.0)

            xm = x * mask                                          # (C, sub)

            # Dice lane-wise partials: pure elementwise VPU adds.
            dnum_ref[...] += xm
            osum_ref[...] += x
            tsum_ref[...] += mask

            # Weighted cross-entropy: lse over classes, reuse xm for x[target].
            mx = jnp.max(x, axis=0, keepdims=True)                 # (1, sub)
            lse = mx + jnp.log(jnp.sum(jnp.exp(x - mx), axis=0, keepdims=True))
            x_t = jnp.sum(xm, axis=0, keepdims=True)               # (1, sub)
            w_pix = jnp.sum(w * mask, axis=0, keepdims=True)       # (1, sub)
            cen_ref[...] += w_pix * (lse - x_t)
            cden_ref[...] += w_pix

        # Cross-lane reductions + tiny output stores only once per batch.
        @pl.when(pi == pl.num_programs(1) - 1)
        def _():
            dice_ref[...] = jnp.stack(
                [jnp.sum(dnum_ref[...], axis=1),
                 jnp.sum(osum_ref[...], axis=1),
                 jnp.sum(tsum_ref[...], axis=1)], axis=0)          # (3, C)
            ce_ref[...] = jnp.concatenate(
                [jnp.sum(cen_ref[...], axis=1, keepdims=True),
                 jnp.sum(cden_ref[...], axis=1, keepdims=True)], axis=1)  # (1, 2)

    return kernel


@functools.partial(jax.jit, static_argnames=("tile_n",))
def softmax_dice_loss(output, target, weight, tile_n=32768):
    """JAX/Pallas equivalent of softmax_dice.forward(output, target, weight).

    output : (b, C, d, h, w) logits (f32 or bf16), C == 4
    target : (b, d, h, w)    integer labels in [0, C)
    weight : (C,)            per-class cross-entropy weight
    """
    b, C, d, h, w = output.shape
    dhw = d * h * w

    # Transpose-free, upcast-free glue: pure reshapes only.
    x = output.reshape(b, C, dhw)
    t = target.astype(jnp.int32).reshape(b, 1, dhw)
    wgt = weight.astype(jnp.float32).reshape(C, 1)

    # Pixel tile (lane axis): multiple of 128, capped by tile_n.
    tn = min(_round_up(dhw, 128), _round_up(tile_n, 128))
    sub = 128
    for cand in (2048, 1024, 512, 256, 128):
        if tn % cand == 0:
            sub = cand
            break
    n_pi = pl.cdiv(dhw, tn)

    kernel = _make_kernel(C=C, tn=tn, sub=sub, dhw=dhw)

    dice_stats, ce_stats = pl.pallas_call(
        kernel,
        out_shape=(
            jax.ShapeDtypeStruct((b, 3, C), jnp.float32),
            jax.ShapeDtypeStruct((b, 1, 2), jnp.float32),
        ),
        grid_spec=pltpu.PrefetchScalarGridSpec(
            num_scalar_prefetch=0,
            grid=(b, n_pi),
            in_specs=[
                pl.BlockSpec((None, C, tn), lambda bi, pi: (bi, 0, pi)),  # logits
                pl.BlockSpec((None, 1, tn), lambda bi, pi: (bi, 0, pi)),  # targets
                pl.BlockSpec((C, 1), lambda bi, pi: (0, 0)),              # weights
            ],
            out_specs=[
                pl.BlockSpec((None, 3, C), lambda bi, pi: (bi, 0, 0)),    # per-batch
                pl.BlockSpec((None, 1, 2), lambda bi, pi: (bi, 0, 0)),    # per-batch
            ],
            scratch_shapes=[
                pltpu.VMEM((C, sub), jnp.float32),   # dice_num lane partials
                pltpu.VMEM((C, sub), jnp.float32),   # out_sum  lane partials
                pltpu.VMEM((C, sub), jnp.float32),   # tgt_sum  lane partials
                pltpu.VMEM((1, sub), jnp.float32),   # ce numerator partials
                pltpu.VMEM((1, sub), jnp.float32),   # ce denominator partials
            ],
        ),
        compiler_params=pltpu.CompilerParams(
            dimension_semantics=("parallel", "arbitrary")),
    )(x, t, wgt)

    eps = 1e-5
    dice_num = jnp.sum(dice_stats[:, 0, :], axis=0)      # (C,)  summed over batch
    out_sum = jnp.sum(dice_stats[:, 1, :], axis=0)
    tgt_sum = jnp.sum(dice_stats[:, 2, :], axis=0)
    dice_losses = 1.0 - 2.0 * dice_num / (out_sum + tgt_sum + eps)
    ce_loss = jnp.sum(ce_stats[:, 0, 0]) / jnp.sum(ce_stats[:, 0, 1])
    return jnp.sum(dice_losses) + ce_loss


def _reference(output, target, weight):
    """Pure-JAX reference mirroring the PyTorch module."""
    eps = 1e-5
    output = output.astype(jnp.float32)
    tgt = target.astype(jnp.int32)
    C = output.shape[1]

    total = jnp.float32(0.0)
    for c in range(C):
        o = output[:, c]
        m = (tgt == c).astype(jnp.float32)
        num = 2.0 * jnp.sum(o * m)
        den = jnp.sum(o) + jnp.sum(m) + eps
        total = total + (1.0 - num / den)

    logp = jax.nn.log_softmax(output, axis=1)                      # (b,C,d,h,w)
    tgt_oh = jax.nn.one_hot(tgt, C, axis=1, dtype=jnp.float32)
    nll = -jnp.sum(logp * tgt_oh, axis=1)                          # (b,d,h,w)
    w_pix = weight.astype(jnp.float32)[tgt]
    ce = jnp.sum(w_pix * nll) / jnp.sum(w_pix)
    return total + ce


if __name__ == "__main__":
    key = jax.random.PRNGKey(0)
    k1, k2 = jax.random.split(key)

    b, C, d, h, w = 2, 4, 8, 16, 16
    output = jax.random.normal(k1, (b, C, d, h, w), dtype=jnp.float32)
    target = jax.random.randint(k2, (b, d, h, w), 0, C, dtype=jnp.int32)
    weight = jnp.array([1.0, 2.0, 0.5, 1.5], dtype=jnp.float32)

    loss = softmax_dice_loss(output, target, weight)
    loss = jax.block_until_ready(loss)

    ref = _reference(output, target, weight)
    assert jnp.allclose(loss, ref, rtol=1e-4, atol=1e-4), (loss, ref)

    print("KERNEL_OK")
</pallas_src>

<mosaic_0001>
module attributes {stable_mosaic.version = 11 : i64} {
  func.func @kernel(%arg0: i32, %arg1: i32, %arg2: memref<1x4x2048xf32, #tpu.memory_space<vmem>>, %arg3: memref<1x1x2048xi32, #tpu.memory_space<vmem>>, %arg4: memref<4x1xf32, #tpu.memory_space<vmem>>, %arg5: memref<1x3x4xf32, #tpu.memory_space<vmem>>, %arg6: memref<1x1x2xf32, #tpu.memory_space<vmem>>, %arg7: memref<4x2048xf32, #tpu.memory_space<vmem>>, %arg8: memref<4x2048xf32, #tpu.memory_space<vmem>>, %arg9: memref<4x2048xf32, #tpu.memory_space<vmem>>, %arg10: memref<1x2048xf32, #tpu.memory_space<vmem>>, %arg11: memref<1x2048xf32, #tpu.memory_space<vmem>>) attributes {dimension_semantics = [#tpu.dimension_semantics<parallel>, #tpu.dimension_semantics<arbitrary>], iteration_bounds = array<i64: 2, 1>, scalar_prefetch = 0 : i64, scratch_operands = 5 : i64, tpu.core_type = #tpu.core_type<tc>, window_params = [{transform_indices = @transform_0, window_bounds = array<i64: 1, 4, 2048>}, {transform_indices = @transform_1, window_bounds = array<i64: 1, 1, 2048>}, {pipeline_mode = #tpu.pipeline_mode<synchronous>, transform_indices = @transform_2, window_bounds = array<i64: 4, 1>}, {transform_indices = @transform_3, window_bounds = array<i64: 1, 3, 4>}, {transform_indices = @transform_4, window_bounds = array<i64: 1, 1, 2>}]} {
    %c0_i32 = arith.constant 0 : i32
    %0 = arith.cmpi eq, %arg1, %c0_i32 : i32
    %1 = arith.extui %0 : i1 to i32
    %c0_i32_0 = arith.constant 0 : i32
    %2 = arith.cmpi ne, %1, %c0_i32_0 : i32
    scf.if %2 {
      %cst_33 = arith.constant 0.000000e+00 : f32
      %49 = vector.broadcast %cst_33 : f32 to vector<4x2048xf32>
      %c0_34 = arith.constant 0 : index
      %c0_35 = arith.constant 0 : index
      %50 = vector.load %arg7[%c0_34, %c0_35] : memref<4x2048xf32, #tpu.memory_space<vmem>>, vector<4x2048xf32>
      tpu.vector_store %arg7[%c0_34, %c0_35], %49 {strides = array<i32>} : memref<4x2048xf32, #tpu.memory_space<vmem>>, vector<4x2048xf32>,
      %cst_36 = arith.constant 0.000000e+00 : f32
      %51 = vector.broadcast %cst_36 : f32 to vector<4x2048xf32>
      %c0_37 = arith.constant 0 : index
      %c0_38 = arith.constant 0 : index
      %52 = vector.load %arg8[%c0_37, %c0_38] : memref<4x2048xf32, #tpu.memory_space<vmem>>, vector<4x2048xf32>
      tpu.vector_store %arg8[%c0_37, %c0_38], %51 {strides = array<i32>} : memref<4x2048xf32, #tpu.memory_space<vmem>>, vector<4x2048xf32>,
      %cst_39 = arith.constant 0.000000e+00 : f32
      %53 = vector.broadcast %cst_39 : f32 to vector<4x2048xf32>
      %c0_40 = arith.constant 0 : index
      %c0_41 = arith.constant 0 : index
      %54 = vector.load %arg9[%c0_40, %c0_41] : memref<4x2048xf32, #tpu.memory_space<vmem>>, vector<4x2048xf32>
      tpu.vector_store %arg9[%c0_40, %c0_41], %53 {strides = array<i32>} : memref<4x2048xf32, #tpu.memory_space<vmem>>, vector<4x2048xf32>,
      %cst_42 = arith.constant 0.000000e+00 : f32
      %55 = vector.broadcast %cst_42 : f32 to vector<1x2048xf32>
      %c0_43 = arith.constant 0 : index
      %c0_44 = arith.constant 0 : index
      %56 = vector.load %arg10[%c0_43, %c0_44] : memref<1x2048xf32, #tpu.memory_space<vmem>>, vector<1x2048xf32>
      tpu.vector_store %arg10[%c0_43, %c0_44], %55 {strides = array<i32>} : memref<1x2048xf32, #tpu.memory_space<vmem>>, vector<1x2048xf32>,
      %cst_45 = arith.constant 0.000000e+00 : f32
      %57 = vector.broadcast %cst_45 : f32 to vector<1x2048xf32>
      %c0_46 = arith.constant 0 : index
      %c0_47 = arith.constant 0 : index
      %58 = vector.load %arg11[%c0_46, %c0_47] : memref<1x2048xf32, #tpu.memory_space<vmem>>, vector<1x2048xf32>
      tpu.vector_store %arg11[%c0_46, %c0_47], %57 {strides = array<i32>} : memref<1x2048xf32, #tpu.memory_space<vmem>>, vector<1x2048xf32>,
    } else {
    }
    %c0 = arith.constant 0 : index
    %c0_1 = arith.constant 0 : index
    %3 = vector.load %arg4[%c0, %c0_1] : memref<4x1xf32, #tpu.memory_space<vmem>>, vector<4x1xf32>
    %4 = tpu.iota {dimensions = array<i32: 0>} : vector<4x2048xi32>
    %c0_2 = arith.constant 0 : index
    %c0_3 = arith.constant 0 : index
    %c0_4 = arith.constant 0 : index
    %5 = vector.load %arg2[%c0_2, %c0_3, %c0_4] : memref<1x4x2048xf32, #tpu.memory_space<vmem>>, vector<1x4x2048xf32>
    %6 = vector.shape_cast %5 : vector<1x4x2048xf32> to vector<4x2048xf32>
    %c0_5 = arith.constant 0 : index
    %c0_6 = arith.constant 0 : index
    %c0_7 = arith.constant 0 : index
    %7 = vector.load %arg3[%c0_5, %c0_6, %c0_7] : memref<1x1x2048xi32, #tpu.memory_space<vmem>>, vector<1x1x2048xi32>
    %8 = vector.shape_cast %7 : vector<1x1x2048xi32> to vector<1x2048xi32>
    %9 = vector.broadcast %8 : vector<1x2048xi32> to vector<4x2048xi32>
    %10 = arith.cmpi eq, %9, %4 : vector<4x2048xi32>
    %11 = arith.extui %10 : vector<4x2048xi1> to vector<4x2048xi32>
    %12 = arith.sitofp %11 : vector<4x2048xi32> to vector<4x2048xf32>
    %13 = arith.mulf %6, %12 : vector<4x2048xf32>
    %c0_8 = arith.constant 0 : index
    %c0_9 = arith.constant 0 : index
    %14 = vector.load %arg7[%c0_8, %c0_9] : memref<4x2048xf32, #tpu.memory_space<vmem>>, vector<4x2048xf32>
    %15 = arith.addf %14, %13 : vector<4x2048xf32>
    %c0_10 = arith.constant 0 : index
    %c0_11 = arith.constant 0 : index
    %16 = vector.load %arg7[%c0_10, %c0_11] : memref<4x2048xf32, #tpu.memory_space<vmem>>, vector<4x2048xf32>
    tpu.vector_store %arg7[%c0_10, %c0_11], %15 {strides = array<i32>} : memref<4x2048xf32, #tpu.memory_space<vmem>>, vector<4x2048xf32>,
    %c0_12 = arith.constant 0 : index
    %c0_13 = arith.constant 0 : index
    %17 = vector.load %arg8[%c0_12, %c0_13] : memref<4x2048xf32, #tpu.memory_space<vmem>>, vector<4x2048xf32>
    %18 = arith.addf %17, %6 : vector<4x2048xf32>
    %c0_14 = arith.constant 0 : index
    %c0_15 = arith.constant 0 : index
    %19 = vector.load %arg8[%c0_14, %c0_15] : memref<4x2048xf32, #tpu.memory_space<vmem>>, vector<4x2048xf32>
    tpu.vector_store %arg8[%c0_14, %c0_15], %18 {strides = array<i32>} : memref<4x2048xf32, #tpu.memory_space<vmem>>, vector<4x2048xf32>,
    %c0_16 = arith.constant 0 : index
    %c0_17 = arith.constant 0 : index
    %20 = vector.load %arg9[%c0_16, %c0_17] : memref<4x2048xf32, #tpu.memory_space<vmem>>, vector<4x2048xf32>
    %21 = arith.addf %20, %12 : vector<4x2048xf32>
    %c0_18 = arith.constant 0 : index
    %c0_19 = arith.constant 0 : index
    %22 = vector.load %arg9[%c0_18, %c0_19] : memref<4x2048xf32, #tpu.memory_space<vmem>>, vector<4x2048xf32>
    tpu.vector_store %arg9[%c0_18, %c0_19], %21 {strides = array<i32>} : memref<4x2048xf32, #tpu.memory_space<vmem>>, vector<4x2048xf32>,
    %cst = arith.constant dense<0xFF800000> : vector<2048xf32>
    %23 = vector.multi_reduction <maximumf>, %6, %cst [0] : vector<4x2048xf32> to vector<2048xf32>
    %24 = vector.shape_cast %23 : vector<2048xf32> to vector<1x2048xf32>
    %25 = vector.broadcast %24 : vector<1x2048xf32> to vector<4x2048xf32>
    %26 = arith.subf %6, %25 : vector<4x2048xf32>
    %27 = math.exp %26 : vector<4x2048xf32>
    %cst_20 = arith.constant dense<0.000000e+00> : vector<2048xf32>
    %28 = vector.multi_reduction <add>, %27, %cst_20 [0] : vector<4x2048xf32> to vector<2048xf32>
    %29 = vector.shape_cast %28 : vector<2048xf32> to vector<1x2048xf32>
    %30 = math.log %29 : vector<1x2048xf32>
    %31 = arith.addf %24, %30 : vector<1x2048xf32>
    %cst_21 = arith.constant dense<0.000000e+00> : vector<2048xf32>
    %32 = vector.multi_reduction <add>, %13, %cst_21 [0] : vector<4x2048xf32> to vector<2048xf32>
    %33 = vector.shape_cast %32 : vector<2048xf32> to vector<1x2048xf32>
    %34 = vector.broadcast %3 : vector<4x1xf32> to vector<4x2048xf32>
    %35 = arith.mulf %34, %12 : vector<4x2048xf32>
    %cst_22 = arith.constant dense<0.000000e+00> : vector<2048xf32>
    %36 = vector.multi_reduction <add>, %35, %cst_22 [0] : vector<4x2048xf32> to vector<2048xf32>
    %37 = vector.shape_cast %36 : vector<2048xf32> to vector<1x2048xf32>
    %c0_23 = arith.constant 0 : index
    %c0_24 = arith.constant 0 : index
    %38 = vector.load %arg10[%c0_23, %c0_24] : memref<1x2048xf32, #tpu.memory_space<vmem>>, vector<1x2048xf32>
    %39 = arith.subf %31, %33 : vector<1x2048xf32>
    %40 = arith.mulf %37, %39 : vector<1x2048xf32>
    %41 = arith.addf %38, %40 : vector<1x2048xf32>
    %c0_25 = arith.constant 0 : index
    %c0_26 = arith.constant 0 : index
    %42 = vector.load %arg10[%c0_25, %c0_26] : memref<1x2048xf32, #tpu.memory_space<vmem>>, vector<1x2048xf32>
    tpu.vector_store %arg10[%c0_25, %c0_26], %41 {strides = array<i32>} : memref<1x2048xf32, #tpu.memory_space<vmem>>, vector<1x2048xf32>,
    %c0_27 = arith.constant 0 : index
    %c0_28 = arith.constant 0 : index
    %43 = vector.load %arg11[%c0_27, %c0_28] : memref<1x2048xf32, #tpu.memory_space<vmem>>, vector<1x2048xf32>
    %44 = arith.addf %43, %37 : vector<1x2048xf32>
    %c0_29 = arith.constant 0 : index
    %c0_30 = arith.constant 0 : index
    %45 = vector.load %arg11[%c0_29, %c0_30] : memref<1x2048xf32, #tpu.memory_space<vmem>>, vector<1x2048xf32>
    tpu.vector_store %arg11[%c0_29, %c0_30], %44 {strides = array<i32>} : memref<1x2048xf32, #tpu.memory_space<vmem>>, vector<1x2048xf32>,
    %c0_i32_31 = arith.constant 0 : i32
    %46 = arith.cmpi eq, %arg1, %c0_i32_31 : i32
    %47 = arith.extui %46 : i1 to i32
    %c0_i32_32 = arith.constant 0 : i32
    %48 = arith.cmpi ne, %47, %c0_i32_32 : i32
    scf.if %48 {
      %c0_33 = arith.constant 0 : index
      %c0_34 = arith.constant 0 : index
      %49 = vector.load %arg7[%c0_33, %c0_34] : memref<4x2048xf32, #tpu.memory_space<vmem>>, vector<4x2048xf32>
      %cst_35 = arith.constant dense<0.000000e+00> : vector<4xf32>
      %50 = vector.multi_reduction <add>, %49, %cst_35 [1] : vector<4x2048xf32> to vector<4xf32>
      %c0_36 = arith.constant 0 : index
      %c0_37 = arith.constant 0 : index
      %51 = vector.load %arg8[%c0_36, %c0_37] : memref<4x2048xf32, #tpu.memory_space<vmem>>, vector<4x2048xf32>
      %cst_38 = arith.constant dense<0.000000e+00> : vector<4xf32>
      %52 = vector.multi_reduction <add>, %51, %cst_38 [1] : vector<4x2048xf32> to vector<4xf32>
      %c0_39 = arith.constant 0 : index
      %c0_40 = arith.constant 0 : index
      %53 = vector.load %arg9[%c0_39, %c0_40] : memref<4x2048xf32, #tpu.memory_space<vmem>>, vector<4x2048xf32>
      %cst_41 = arith.constant dense<0.000000e+00> : vector<4xf32>
      %54 = vector.multi_reduction <add>, %53, %cst_41 [1] : vector<4x2048xf32> to vector<4xf32>
      %55 = vector.shape_cast %50 : vector<4xf32> to vector<1x4xf32>
      %56 = vector.shape_cast %52 : vector<4xf32> to vector<1x4xf32>
      %57 = vector.shape_cast %54 : vector<4xf32> to vector<1x4xf32>
      %58 = tpu.concatenate %55, %56, %57 in 0 : vector<1x4xf32>, vector<1x4xf32>, vector<1x4xf32> -> vector<3x4xf32>
      %c0_42 = arith.constant 0 : index
      %c0_43 = arith.constant 0 : index
      %c0_44 = arith.constant 0 : index
      %59 = vector.load %arg5[%c0_42, %c0_43, %c0_44] : memref<1x3x4xf32, #tpu.memory_space<vmem>>, vector<1x3x4xf32>
      %60 = vector.shape_cast %59 : vector<1x3x4xf32> to vector<3x4xf32>
      %61 = vector.shape_cast %58 : vector<3x4xf32> to vector<1x3x4xf32>
      tpu.vector_store %arg5[%c0_42, %c0_43, %c0_44], %61 {strides = array<i32>} : memref<1x3x4xf32, #tpu.memory_space<vmem>>, vector<1x3x4xf32>,
      %c0_45 = arith.constant 0 : index
      %c0_46 = arith.constant 0 : index
      %62 = vector.load %arg10[%c0_45, %c0_46] : memref<1x2048xf32, #tpu.memory_space<vmem>>, vector<1x2048xf32>
      %cst_47 = arith.constant dense<0.000000e+00> : vector<1xf32>
      %63 = vector.multi_reduction <add>, %62, %cst_47 [1] : vector<1x2048xf32> to vector<1xf32>
      %64 = vector.shape_cast %63 : vector<1xf32> to vector<1x1xf32>
      %c0_48 = arith.constant 0 : index
      %c0_49 = arith.constant 0 : index
      %65 = vector.load %arg11[%c0_48, %c0_49] : memref<1x2048xf32, #tpu.memory_space<vmem>>, vector<1x2048xf32>
      %cst_50 = arith.constant dense<0.000000e+00> : vector<1xf32>
      %66 = vector.multi_reduction <add>, %65, %cst_50 [1] : vector<1x2048xf32> to vector<1xf32>
      %67 = vector.shape_cast %66 : vector<1xf32> to vector<1x1xf32>
      %68 = tpu.concatenate %64, %67 in 1 : vector<1x1xf32>, vector<1x1xf32> -> vector<1x2xf32>
      %c0_51 = arith.constant 0 : index
      %c0_52 = arith.constant 0 : index
      %c0_53 = arith.constant 0 : index
      %69 = vector.load %arg6[%c0_51, %c0_52, %c0_53] : memref<1x1x2xf32, #tpu.memory_space<vmem>>, vector<1x1x2xf32>
      %70 = vector.shape_cast %69 : vector<1x1x2xf32> to vector<1x2xf32>
      %71 = vector.shape_cast %68 : vector<1x2xf32> to vector<1x1x2xf32>
      tpu.vector_store %arg6[%c0_51, %c0_52, %c0_53], %71 {strides = array<i32>} : memref<1x1x2xf32, #tpu.memory_space<vmem>>, vector<1x1x2xf32>,
    } else {
    }
    return
  }
  func.func @transform_0(%arg0: i32, %arg1: i32) -> (i32, i32, i32) {
    %c0_i32 = arith.constant 0 : i32
    %c0_i32_0 = arith.constant 0 : i32
    return %arg0, %c0_i32, %arg1 : i32, i32, i32
  }
  func.func @transform_1(%arg0: i32, %arg1: i32) -> (i32, i32, i32) {
    %c0_i32 = arith.constant 0 : i32
    %c0_i32_0 = arith.constant 0 : i32
    return %arg0, %c0_i32, %arg1 : i32, i32, i32
  }
  func.func @transform_2(%arg0: i32, %arg1: i32) -> (i32, i32) {
    %c0_i32 = arith.constant 0 : i32
    %c0_i32_0 = arith.constant 0 : i32
    %c0_i32_1 = arith.constant 0 : i32
    return %c0_i32, %c0_i32_0 : i32, i32
  }
  func.func @transform_3(%arg0: i32, %arg1: i32) -> (i32, i32, i32) {
    %c0_i32 = arith.constant 0 : i32
    %c0_i32_0 = arith.constant 0 : i32
    %c0_i32_1 = arith.constant 0 : i32
    return %arg0, %c0_i32, %c0_i32_0 : i32, i32, i32
  }
  func.func @transform_4(%arg0: i32, %arg1: i32) -> (i32, i32, i32) {
    %c0_i32 = arith.constant 0 : i32
    %c0_i32_0 = arith.constant 0 : i32
    %c0_i32_1 = arith.constant 0 : i32
    return %arg0, %c0_i32, %c0_i32_0 : i32, i32, i32
  }
}

</mosaic_0001>

<llo_original>
// kernel: softmax_dice_loss.1
$region0: #{softmax_dice_loss.1}
  #allocation0 [shape = 'u32[]', space=smem, size = 0x4, offset = 0x4, fixed_abs, tag = 'smem constant byte address 0x4 - core index']
  #allocation1 [shape = 'u32[144,128]{1,0:T(1,128)}', space=vmem, size = 0x12000, scoped, tag = 'internal scratch']
  #allocation2 [shape = 'f32[4,2048]{1,0:T(4,128)}', space=vmem, size = 0x8000, scoped, tag = 'scratch operand']
  #allocation3 [shape = 'f32[4,2048]{1,0:T(4,128)}', space=vmem, size = 0x8000, scoped, tag = 'scratch operand']
  #allocation4 [shape = 'f32[4,2048]{1,0:T(4,128)}', space=vmem, size = 0x8000, scoped, tag = 'scratch operand']
  #allocation5 [shape = 'f32[1,2048]{1,0:T(1,128)}', space=vmem, size = 0x2000, scoped, tag = 'scratch operand']
  #allocation6 [shape = 'f32[1,2048]{1,0:T(1,128)}', space=vmem, size = 0x2000, scoped, tag = 'scratch operand']
  %s0 = inlined_call_operand.vmem [shape: f32[2,4,2048], index: 0, kind: input, shape index: {}]
  %s1 = inlined_call_operand.vmem [shape: s32[2,1,2048], index: 1, kind: input, shape index: {}]
  %s2 = inlined_call_operand.vmem [shape: f32[4,1], index: 2, kind: input, shape index: {}]
  %s3 = inlined_call_operand.vmem [shape: f32[2,3,4], index: 3, kind: output, shape index: {0}]
  %s4 = inlined_call_operand.vmem [shape: f32[2,1,2], index: 4, kind: output, shape index: {1}]
  %5 = xla_tuple %s3, %s4
  %s6 = sld [smem:[#allocation0]]
  $region61: #{softmax_dice_loss.1} parent=0
    _
  %s8 = ssub.s32 1, %s6
  %s9 = scalar_select 0, %s8, %s6
  loop: start=0, step=1, limit=4
  $region2: #{softmax_dice_loss.1} parent=0 // loop_pre_header
    _
  $region3: #{softmax_dice_loss.1} parent=0 // loop_header
    %s11 = sphi 0, %s15
    %p12 = scmp.ge.s32.totalorder %s11, 4
    %s18 = sphi 0, %s30
    %s19 = sphi 0, %s26
    %s20 = sphi 0, %s18
    %s21 = sphi 0, %s19
    %s22 = sphi 0, %s20
    %s23 = sphi 0, %s21
    %s35 = sphi 0, %s37
    %s38 = sphi 0, %s35
    %s39 = sphi 0, %s38
    %s55 = sphi 0, %s39
    %s63 = sphi 0, %s65
    %s66 = sphi 0, %s63
    %s67 = sphi 0, %s66
    %s83 = sphi 0, %s67
    %s87 = sphi 0, %s87
    %s89 = sphi 0, %s87
    %s90 = sphi 0, %s89
    %s104 = sphi 0, %s90
    %s110 = sphi 0, %s112
    %s113 = sphi 0, %s110
    %s114 = sphi 0, %s113
    %s130 = sphi 0, %s114
    %s136 = sphi 0, %s138
    %s139 = sphi 0, %s136
    %s140 = sphi 0, %s139
    %s156 = sphi 0, %s140
  $region4: #{softmax_dice_loss.1} parent=0 // loop_header_branch
    %14 = sbr.rel (%p12) target = $region8
  $region5: #{softmax_dice_loss.1} parent=0 // loop_body
    %s16 = ssub.s32 %s11, 1
    %s17 = ssub.s32 %s11, 2
    %s24 = sadd.s32 1, %s19
    %p25 = scmp.ge.s32.totalorder %s24, 1
    %s26 = scalar_select %p25, 0, %s24
    %s27 = sadd.s32 1, %s18
    %s28 = scalar_select %p25, %s27, %s18
    %p29 = scmp.ge.s32.totalorder %s28, 2
    %s30 = scalar_select %p29, 0, %s28
    %s31 = ssub.s32 %s18, %s30
    %s32 = ssub.s32 %s19, %s26
    %s33 = sor.u32 %s31, %s32
    %p34 = scmp.eq.s32.totalorder %s33, 0
    %s36 = sadd.s32 %s35, 1
    %s37 = scalar_select %p34, %s35, %s36
    %p40 = pneg %p34
    %p41 = scmp.eq.s32.totalorder %s11, 1
    %p42 = por %p40, %p41
    %p43 = scmp.ne.s32.totalorder %s35, %s38
    %p44 = scmp.eq.s32.totalorder %s11, 0
    %p45 = por %p43, %p44
    %p46 = scmp.ne.s32.totalorder %s35, %s38
    %p47 = scmp.eq.s32.totalorder %s16, 1
    %p48 = por %p46, %p47
    %p49 = scmp.ne.s32.totalorder %s38, %s39
    %p50 = scmp.eq.s32.totalorder %s16, 0
    %p51 = por %p49, %p50
    %p52 = scmp.ne.s32.totalorder %s38, %s39
    %p53 = scmp.eq.s32.totalorder %s17, 1
    %p54 = por %p52, %p53
    %p56 = scmp.ne.s32.totalorder %s39, %s55
    %p57 = scmp.eq.s32.totalorder %s17, 0
    %p58 = por %p56, %p57
    %s59 = ssub.s32 %s18, %s30
    %s60 = ssub.s32 %s19, %s26
    %s61 = sor.u32 %s59, %s60
    %p62 = scmp.eq.s32.totalorder %s61, 0
    %s64 = sadd.s32 %s63, 1
    %s65 = scalar_select %p62, %s63, %s64
    %p68 = pneg %p62
    %p69 = scmp.eq.s32.totalorder %s11, 1
    %p70 = por %p68, %p69
    %p71 = scmp.ne.s32.totalorder %s63, %s66
    %p72 = scmp.eq.s32.totalorder %s11, 0
    %p73 = por %p71, %p72
    %p74 = scmp.ne.s32.totalorder %s63, %s66
    %p75 = scmp.eq.s32.totalorder %s16, 1
    %p76 = por %p74, %p75
    %p77 = scmp.ne.s32.totalorder %s66, %s67
    %p78 = scmp.eq.s32.totalorder %s16, 0
    %p79 = por %p77, %p78
    %p80 = scmp.ne.s32.totalorder %s66, %s67
    %p81 = scmp.eq.s32.totalorder %s17, 1
    %p82 = por %p80, %p81
    %p84 = scmp.ne.s32.totalorder %s67, %s83
    %p85 = scmp.eq.s32.totalorder %s17, 0
    %p86 = por %p84, %p85
    %s88 = sadd.s32 %s87, 1
    %p91 = scmp.eq.s32.totalorder %s11, 1
    %p92 = scmp.ne.s32.totalorder %s87, %s89
    %p93 = scmp.eq.s32.totalorder %s11, 0
    %p94 = por %p92, %p93
    %p95 = scmp.ne.s32.totalorder %s87, %s89
    %p96 = scmp.eq.s32.totalorder %s16, 1
    %p97 = por %p95, %p96
    %p98 = scmp.ne.s32.totalorder %s89, %s90
    %p99 = scmp.eq.s32.totalorder %s16, 0
    %p100 = por %p98, %p99
    %p101 = scmp.ne.s32.totalorder %s89, %s90
    %p102 = scmp.eq.s32.totalorder %s17, 1
    %p103 = por %p101, %p102
    %p105 = scmp.ne.s32.totalorder %s90, %s104
    %p106 = scmp.eq.s32.totalorder %s17, 0
    %p107 = por %p105, %p106
    %s108 = ssub.s32 %s18, %s30
    %p109 = scmp.eq.s32.totalorder %s108, 0
    %s111 = sadd.s32 %s110, 1
    %s112 = scalar_select %p109, %s110, %s111
    %p115 = pneg %p109
    %p116 = scmp.eq.s32.totalorder %s11, 1
    %p117 = por %p115, %p116
    %p118 = scmp.ne.s32.totalorder %s110, %s113
    %p119 = scmp.eq.s32.totalorder %s11, 0
    %p120 = por %p118, %p119
    %p121 = scmp.ne.s32.totalorder %s110, %s113
    %p122 = scmp.eq.s32.totalorder %s16, 1
    %p123 = por %p121, %p122
    %p124 = scmp.ne.s32.totalorder %s113, %s114
    %p125 = scmp.eq.s32.totalorder %s16, 0
    %p126 = por %p124, %p125
    %p127 = scmp.ne.s32.totalorder %s113, %s114
    %p128 = scmp.eq.s32.totalorder %s17, 1
    %p129 = por %p127, %p128
    %p131 = scmp.ne.s32.totalorder %s114, %s130
    %p132 = scmp.eq.s32.totalorder %s17, 0
    %p133 = por %p131, %p132
    %s134 = ssub.s32 %s18, %s30
    %p135 = scmp.eq.s32.totalorder %s134, 0
    %s137 = sadd.s32 %s136, 1
    %s138 = scalar_select %p135, %s136, %s137
    %p141 = pneg %p135
    %p142 = scmp.eq.s32.totalorder %s11, 1
    %p143 = por %p141, %p142
    %p144 = scmp.ne.s32.totalorder %s136, %s139
    %p145 = scmp.eq.s32.totalorder %s11, 0
    %p146 = por %p144, %p145
    %p147 = scmp.ne.s32.totalorder %s136, %s139
    %p148 = scmp.eq.s32.totalorder %s16, 1
    %p149 = por %p147, %p148
    %p150 = scmp.ne.s32.totalorder %s139, %s140
    %p151 = scmp.eq.s32.totalorder %s16, 0
    %p152 = por %p150, %p151
    %p153 = scmp.ne.s32.totalorder %s139, %s140
    %p154 = scmp.eq.s32.totalorder %s17, 1
    %p155 = por %p153, %p154
    %p157 = scmp.ne.s32.totalorder %s140, %s156
    %p158 = scmp.eq.s32.totalorder %s17, 0
    %p159 = por %p157, %p158
    %p160 = scmp.le.s32.totalorder 1, %s11
    %p161 = scmp.lt.s32.totalorder %s11, 3
    %p162 = pnand %p160, %p161
    %p163 = pneg %p162
    // Predicated region
    $region9: #{softmax_dice_loss.1} parent=5 // pred_check
      _
    $region10: #{softmax_dice_loss.1} parent=5 // pred_check_branch
      %165 = sbr.rel (%p162) target = $region12
    $region11: #{softmax_dice_loss.1} parent=5 // pred_region
      %s166 = ssub.s32 %s11, 1
      // Predicated region
      $region13: #{softmax_dice_loss.1} parent=11 // pred_check
        %p167 = pneg %p100
      $region14: #{softmax_dice_loss.1} parent=11 // pred_check_branch
        %169 = sbr.rel (%p167) target = $region16
      $region15: #{softmax_dice_loss.1} parent=11 // pred_region
        _
      $region16: #{softmax_dice_loss.1} parent=11 // pred_fallthru
        _
    $region12: #{softmax_dice_loss.1} parent=5 // pred_fallthru
      _
    %p170 = scmp.lt.s32.totalorder %s11, 2
    // Predicated region
    $region17: #{softmax_dice_loss.1} parent=5 // pred_check
      %p171 = pneg %p170
    $region18: #{softmax_dice_loss.1} parent=5 // pred_check_branch
      %173 = sbr.rel (%p171) target = $region20
    $region19: #{softmax_dice_loss.1} parent=5 // pred_region
      // Predicated region
      $region21: #{softmax_dice_loss.1} parent=19 // pred_check
        %p174 = pneg %p45
      $region22: #{softmax_dice_loss.1} parent=19 // pred_check_branch
        %176 = sbr.rel (%p174) target = $region24
      $region23: #{softmax_dice_loss.1} parent=19 // pred_region
        %s177 = smul.u32 16, %s19
        %p178 = scmp.lt.s32.totalorder %s18, 1
        %s179 = scalar_select %p178, %s18, 1
        %p180 = scmp.lt.s32.totalorder %s177, 15
        %s181 = scalar_select %p180, %s177, 15
        %s182 = smul.addr %s179, 16
        %s183 = sadd.s32 %s181, %s182
        %s184 = smul.addr %s183, 4
        %s185 = scalar_lea.vmem %s0, %s184
        %s186 = smul.u32 16, %s19
      $region24: #{softmax_dice_loss.1} parent=19 // pred_fallthru
        _
      // Predicated region
      $region25: #{softmax_dice_loss.1} parent=19 // pred_check
        %p187 = pneg %p73
      $region26: #{softmax_dice_loss.1} parent=19 // pred_check_branch
        %189 = sbr.rel (%p187) target = $region28
      $region27: #{softmax_dice_loss.1} parent=19 // pred_region
        %s190 = smul.u32 16, %s19
        %p191 = scmp.lt.s32.totalorder %s18, 1
        %s192 = scalar_select %p191, %s18, 1
        %p193 = scmp.lt.s32.totalorder %s190, 15
        %s194 = scalar_select %p193, %s190, 15
        %s195 = smul.addr %s192, 16
        %s196 = sadd.s32 %s194, %s195
        %s197 = scalar_lea.vmem %s1, %s196
        %s198 = smul.u32 16, %s19
      $region28: #{softmax_dice_loss.1} parent=19 // pred_fallthru
        _
    $region20: #{softmax_dice_loss.1} parent=5 // pred_fallthru
      _
    %p199 = scmp.le.s32.totalorder 1, %s11
    %p200 = scmp.lt.s32.totalorder %s11, 3
    %p201 = pnand %p199, %p200
    %p202 = pneg %p201
    // Predicated region
    $region29: #{softmax_dice_loss.1} parent=5 // pred_check
      _
    $region30: #{softmax_dice_loss.1} parent=5 // pred_check_branch
      %204 = sbr.rel (%p201) target = $region32
    $region31: #{softmax_dice_loss.1} parent=5 // pred_region
      %s205 = ssub.s32 %s11, 1
      %s206 = smul.u32 16, %s21
      %p207 = scmp.lt.s32.totalorder %s20, 1
      %s208 = scalar_select %p207, %s20, 1
      %p209 = scmp.lt.s32.totalorder %s206, 15
      %s210 = scalar_select %p209, %s206, 15
      %s211 = smul.addr %s208, 16
      %s212 = sadd.s32 %s210, %s211
      %s213 = smul.addr %s212, 4
      %s214 = scalar_lea.vmem %s0, %s213
      %p215 = pneg %p51
      %p216 = pneg %p48
      %s217 = smul.u32 16, %s21
      %p218 = scmp.lt.s32.totalorder %s20, 1
      %s219 = scalar_select %p218, %s20, 1
      %p220 = scmp.lt.s32.totalorder %s217, 15
      %s221 = scalar_select %p220, %s217, 15
      %s222 = smul.addr %s219, 16
      %s223 = sadd.s32 %s221, %s222
      %s224 = scalar_lea.vmem %s1, %s223
      %p225 = pneg %p79
      %p226 = pneg %p76
      %p227 = pneg %p100
      %p228 = pneg %p97
      %p229 = pneg %p126
      %p230 = pneg %p123
      %p231 = scmp.lt.s32.totalorder %s20, 1
      %s232 = scalar_select %p231, %s20, 1
      %s233 = smul.addr %s232, 4
      %s234 = scalar_lea.vmem %s3, %s233
      %p235 = pneg %p152
      %p236 = pneg %p149
      %p237 = scmp.lt.s32.totalorder %s20, 1
      %s238 = scalar_select %p237, %s20, 1
      %s239 = scalar_lea.vmem %s4, %s238
      %s240 = smul.u32 16, %s21
      %p241 = scmp.lt.s32.totalorder %s20, 1
      %s242 = scalar_select %p241, %s20, 1
      %p243 = scmp.lt.s32.totalorder %s240, 15
      %s244 = scalar_select %p243, %s240, 15
      %s245 = smul.addr %s242, 16
      %s246 = sadd.s32 %s244, %s245
      %s247 = smul.addr %s246, 4
      %s248 = scalar_lea.vmem %s0, %s247
      %s249 = smul.u32 16, %s21
      %s250 = smul.u32 16, %s21
      %p251 = scmp.lt.s32.totalorder %s20, 1
      %s252 = scalar_select %p251, %s20, 1
      %p253 = scmp.lt.s32.totalorder %s250, 15
      %s254 = scalar_select %p253, %s250, 15
      %s255 = smul.addr %s252, 16
      %s256 = sadd.s32 %s254, %s255
      %s257 = scalar_lea.vmem %s1, %s256
      %s258 = smul.u32 16, %s21
      %p259 = scmp.lt.s32.totalorder %s20, 1
      %s260 = scalar_select %p259, %s20, 1
      %s261 = smul.addr %s260, 4
      %s262 = scalar_lea.vmem %s3, %s261
      %p263 = scmp.lt.s32.totalorder %s20, 1
      %s264 = scalar_select %p263, %s20, 1
      %s265 = scalar_lea.vmem %s4, %s264
      %p266 = scmp.eq.s32.totalorder %s21, 0
      // Predicated region
      $region33: #{softmax_dice_loss.1} parent=31 // pred_check
        %p267 = pneg %p266
      $region34: #{softmax_dice_loss.1} parent=31 // pred_check_branch
        %269 = sbr.rel (%p267) target = $region36
      $region35: #{softmax_dice_loss.1} parent=31 // pred_region
        %270 = vst [vmem:[#allocation2] sm:$0xff] 0.0
        %271 = vst [vmem:[#allocation2 + $0x8] sm:$0xff] 0.0
        %272 = vst [vmem:[#allocation2 + $0x10] sm:$0xff] 0.0
        %273 = vst [vmem:[#allocation2 + $0x18] sm:$0xff] 0.0
        %274 = vst [vmem:[#allocation2 + $0x20] sm:$0xff] 0.0
        %275 = vst [vmem:[#allocation2 + $0x28] sm:$0xff] 0.0
        %276 = vst [vmem:[#allocation2 + $0x30] sm:$0xff] 0.0
        %277 = vst [vmem:[#allocation2 + $0x38] sm:$0xff] 0.0
        %278 = vst [vmem:[#allocation3] sm:$0xff] 0.0
        %279 = vst [vmem:[#allocation3 + $0x8] sm:$0xff] 0.0
        %280 = vst [vmem:[#allocation3 + $0x10] sm:$0xff] 0.0
        %281 = vst [vmem:[#allocation3 + $0x18] sm:$0xff] 0.0
        %282 = vst [vmem:[#allocation3 + $0x20] sm:$0xff] 0.0
        %283 = vst [vmem:[#allocation3 + $0x28] sm:$0xff] 0.0
        %284 = vst [vmem:[#allocation3 + $0x30] sm:$0xff] 0.0
        %285 = vst [vmem:[#allocation3 + $0x38] sm:$0xff] 0.0
        %286 = vst [vmem:[#allocation4] sm:$0xff] 0.0
        %287 = vst [vmem:[#allocation4 + $0x8] sm:$0xff] 0.0
        %288 = vst [vmem:[#allocation4 + $0x10] sm:$0xff] 0.0
        %289 = vst [vmem:[#allocation4 + $0x18] sm:$0xff] 0.0
        %290 = vst [vmem:[#allocation4 + $0x20] sm:$0xff] 0.0
        %291 = vst [vmem:[#allocation4 + $0x28] sm:$0xff] 0.0
        %292 = vst [vmem:[#allocation4 + $0x30] sm:$0xff] 0.0
        %293 = vst [vmem:[#allocation4 + $0x38] sm:$0xff] 0.0
        %294 = vst [vmem:[#allocation5] sm:$0xff] 0.0
        %295 = vst [vmem:[#allocation5 + $0x8] sm:$0xff] 0.0
        %296 = vst [vmem:[#allocation6] sm:$0xff] 0.0
        %297 = vst [vmem:[#allocation6 + $0x8] sm:$0xff] 0.0
      $region36: #{softmax_dice_loss.1} parent=31 // pred_fallthru
        _
      %v298 = vld [vmem:[%s2] sm:$0xf]
      %v299 = vlaneseq
      %v300 = vshrl.u32 %v299, 7
      %v301 = vld [vmem:[%s248] sm:$0xff]
      %v302 = vld [vmem:[%s248 + $0x8] sm:$0xff]
      %v303 = vld [vmem:[%s248 + $0x10] sm:$0xff]
      %v304 = vld [vmem:[%s248 + $0x18] sm:$0xff]
      %v305 = vld [vmem:[%s248 + $0x20] sm:$0xff]
      %v306 = vld [vmem:[%s248 + $0x28] sm:$0xff]
      %v307 = vld [vmem:[%s248 + $0x30] sm:$0xff]
      %v308 = vld [vmem:[%s248 + $0x38] sm:$0xff]
      %v309 = vld [vmem:[%s257] sm:$0xff]
      %v310 = vld [vmem:[%s257 + $0x8] sm:$0xff]
      %v311 = vlaneseq
      %v312 = vshrl.u32 %v311, 7
      %v313 = vsub.s32 0, %v312
      %v314 = vrot.slane %v309, %v313
      %v315 = vlaneseq
      %v316 = vshrl.u32 %v315, 7
      %v317 = vsub.s32 1, %v316
      %v318 = vrot.slane %v309, %v317
      %v319 = vlaneseq
      %v320 = vshrl.u32 %v319, 7
      %v321 = vsub.s32 2, %v320
      %v322 = vrot.slane %v309, %v321
      %v323 = vlaneseq
      %v324 = vshrl.u32 %v323, 7
      %v325 = vsub.s32 3, %v324
      %v326 = vrot.slane %v309, %v325
      %v327 = vlaneseq
      %v328 = vshrl.u32 %v327, 7
      %v329 = vsub.s32 4, %v328
      %v330 = vrot.slane %v309, %v329
      %v331 = vlaneseq
      %v332 = vshrl.u32 %v331, 7
      %v333 = vsub.s32 5, %v332
      %v334 = vrot.slane %v309, %v333
      %v335 = vlaneseq
      %v336 = vshrl.u32 %v335, 7
      %v337 = vsub.s32 6, %v336
      %v338 = vrot.slane %v309, %v337
      %v339 = vlaneseq
      %v340 = vshrl.u32 %v339, 7
      %v341 = vsub.s32 7, %v340
      %v342 = vrot.slane %v309, %v341
      %v343 = vlaneseq
      %v344 = vshrl.u32 %v343, 7
      %v345 = vsub.s32 0, %v344
      %v346 = vrot.slane %v310, %v345
      %v347 = vlaneseq
      %v348 = vshrl.u32 %v347, 7
      %v349 = vsub.s32 1, %v348
      %v350 = vrot.slane %v310, %v349
      %v351 = vlaneseq
      %v352 = vshrl.u32 %v351, 7
      %v353 = vsub.s32 2, %v352
      %v354 = vrot.slane %v310, %v353
      %v355 = vlaneseq
      %v356 = vshrl.u32 %v355, 7
      %v357 = vsub.s32 3, %v356
      %v358 = vrot.slane %v310, %v357
      %v359 = vlaneseq
      %v360 = vshrl.u32 %v359, 7
      %v361 = vsub.s32 4, %v360
      %v362 = vrot.slane %v310, %v361
      %v363 = vlaneseq
      %v364 = vshrl.u32 %v363, 7
      %v365 = vsub.s32 5, %v364
      %v366 = vrot.slane %v310, %v365
      %v367 = vlaneseq
      %v368 = vshrl.u32 %v367, 7
      %v369 = vsub.s32 6, %v368
      %v370 = vrot.slane %v310, %v369
      %v371 = vlaneseq
      %v372 = vshrl.u32 %v371, 7
      %v373 = vsub.s32 7, %v372
      %v374 = vrot.slane %v310, %v373
      %vm375 = vcmp.eq.s32.totalorder %v314, %v300
      %vm376 = vcmp.eq.s32.totalorder %v318, %v300
      %vm377 = vcmp.eq.s32.totalorder %v322, %v300
      %vm378 = vcmp.eq.s32.totalorder %v326, %v300
      %vm379 = vcmp.eq.s32.totalorder %v330, %v300
      %vm380 = vcmp.eq.s32.totalorder %v334, %v300
      %vm381 = vcmp.eq.s32.totalorder %v338, %v300
      %vm382 = vcmp.eq.s32.totalorder %v342, %v300
      %vm383 = vcmp.eq.s32.totalorder %v346, %v300
      %vm384 = vcmp.eq.s32.totalorder %v350, %v300
      %vm385 = vcmp.eq.s32.totalorder %v354, %v300
      %vm386 = vcmp.eq.s32.totalorder %v358, %v300
      %vm387 = vcmp.eq.s32.totalorder %v362, %v300
      %vm388 = vcmp.eq.s32.totalorder %v366, %v300
      %vm389 = vcmp.eq.s32.totalorder %v370, %v300
      %vm390 = vcmp.eq.s32.totalorder %v374, %v300
      %v391 = vsel %vm375, 1, 0
      %v392 = vsel %vm376, 1, 0
      %v393 = vsel %vm377, 1, 0
      %v394 = vsel %vm378, 1, 0
      %v395 = vsel %vm379, 1, 0
      %v396 = vsel %vm380, 1, 0
      %v397 = vsel %vm381, 1, 0
      %v398 = vsel %vm382, 1, 0
      %v399 = vsel %vm383, 1, 0
      %v400 = vsel %vm384, 1, 0
      %v401 = vsel %vm385, 1, 0
      %v402 = vsel %vm386, 1, 0
      %v403 = vsel %vm387, 1, 0
      %v404 = vsel %vm388, 1, 0
      %v405 = vsel %vm389, 1, 0
      %v406 = vsel %vm390, 1, 0
      %v407 = vcvt.s32.f32 %v391
      %v408 = vcvt.s32.f32 %v392
      %v409 = vcvt.s32.f32 %v393
      %v410 = vcvt.s32.f32 %v394
      %v411 = vcvt.s32.f32 %v395
      %v412 = vcvt.s32.f32 %v396
      %v413 = vcvt.s32.f32 %v397
      %v414 = vcvt.s32.f32 %v398
      %v415 = vcvt.s32.f32 %v399
      %v416 = vcvt.s32.f32 %v400
      %v417 = vcvt.s32.f32 %v401
      %v418 = vcvt.s32.f32 %v402
      %v419 = vcvt.s32.f32 %v403
      %v420 = vcvt.s32.f32 %v404
      %v421 = vcvt.s32.f32 %v405
      %v422 = vcvt.s32.f32 %v406
      %v439 = vcombine.low %v407, %v408
      %v440 = vcombine.low %v409, %v410
      %v441 = vcombine.low %v411, %v412
      %v442 = vcombine.low %v413, %v414
      %v443 = vcombine.low %v415, %v416
      %v444 = vcombine.low %v417, %v418
      %v445 = vcombine.low %v419, %v420
      %v446 = vcombine.low %v421, %v422
      %v455 = vmul.f32 %v301, %v439
      %v456 = vmul.f32 %v302, %v440
      %v457 = vmul.f32 %v303, %v441
      %v458 = vmul.f32 %v304, %v442
      %v459 = vmul.f32 %v305, %v443
      %v460 = vmul.f32 %v306, %v444
      %v461 = vmul.f32 %v307, %v445
      %v462 = vmul.f32 %v308, %v446
      %v463 = vld [vmem:[#allocation2] sm:$0xff]
      %v464 = vld [vmem:[#allocation2 + $0x8] sm:$0xff]
      %v465 = vld [vmem:[#allocation2 + $0x10] sm:$0xff]
      %v466 = vld [vmem:[#allocation2 + $0x18] sm:$0xff]
      %v467 = vld [vmem:[#allocation2 + $0x20] sm:$0xff]
      %v468 = vld [vmem:[#allocation2 + $0x28] sm:$0xff]
      %v469 = vld [vmem:[#allocation2 + $0x30] sm:$0xff]
      %v470 = vld [vmem:[#allocation2 + $0x38] sm:$0xff]
      %v471 = vadd.f32 %v463, %v455
      %v472 = vadd.f32 %v464, %v456
      %v473 = vadd.f32 %v465, %v457
      %v474 = vadd.f32 %v466, %v458
      %v475 = vadd.f32 %v467, %v459
      %v476 = vadd.f32 %v468, %v460
      %v477 = vadd.f32 %v469, %v461
      %v478 = vadd.f32 %v470, %v462
      %479 = vst [vmem:[#allocation2] sm:$0xff] %v471
      %480 = vst [vmem:[#allocation2 + $0x8] sm:$0xff] %v472
      %481 = vst [vmem:[#allocation2 + $0x10] sm:$0xff] %v473
      %482 = vst [vmem:[#allocation2 + $0x18] sm:$0xff] %v474
      %483 = vst [vmem:[#allocation2 + $0x20] sm:$0xff] %v475
      %484 = vst [vmem:[#allocation2 + $0x28] sm:$0xff] %v476
      %485 = vst [vmem:[#allocation2 + $0x30] sm:$0xff] %v477
      %486 = vst [vmem:[#allocation2 + $0x38] sm:$0xff] %v478
      %v487 = vld [vmem:[#allocation3] sm:$0xff]
      %v488 = vld [vmem:[#allocation3 + $0x8] sm:$0xff]
      %v489 = vld [vmem:[#allocation3 + $0x10] sm:$0xff]
      %v490 = vld [vmem:[#allocation3 + $0x18] sm:$0xff]
      %v491 = vld [vmem:[#allocation3 + $0x20] sm:$0xff]
      %v492 = vld [vmem:[#allocation3 + $0x28] sm:$0xff]
      %v493 = vld [vmem:[#allocation3 + $0x30] sm:$0xff]
      %v494 = vld [vmem:[#allocation3 + $0x38] sm:$0xff]
      %v495 = vadd.f32 %v487, %v301
      %v496 = vadd.f32 %v488, %v302
      %v497 = vadd.f32 %v489, %v303
      %v498 = vadd.f32 %v490, %v304
      %v499 = vadd.f32 %v491, %v305
      %v500 = vadd.f32 %v492, %v306
      %v501 = vadd.f32 %v493, %v307
      %v502 = vadd.f32 %v494, %v308
      %503 = vst [vmem:[#allocation3] sm:$0xff] %v495
      %504 = vst [vmem:[#allocation3 + $0x8] sm:$0xff] %v496
      %505 = vst [vmem:[#allocation3 + $0x10] sm:$0xff] %v497
      %506 = vst [vmem:[#allocation3 + $0x18] sm:$0xff] %v498
      %507 = vst [vmem:[#allocation3 + $0x20] sm:$0xff] %v499
      %508 = vst [vmem:[#allocation3 + $0x28] sm:$0xff] %v500
      %509 = vst [vmem:[#allocation3 + $0x30] sm:$0xff] %v501
      %510 = vst [vmem:[#allocation3 + $0x38] sm:$0xff] %v502
      %v511 = vld [vmem:[#allocation4] sm:$0xff]
      %v512 = vld [vmem:[#allocation4 + $0x8] sm:$0xff]
      %v513 = vld [vmem:[#allocation4 + $0x10] sm:$0xff]
      %v514 = vld [vmem:[#allocation4 + $0x18] sm:$0xff]
      %v515 = vld [vmem:[#allocation4 + $0x20] sm:$0xff]
      %v516 = vld [vmem:[#allocation4 + $0x28] sm:$0xff]
      %v517 = vld [vmem:[#allocation4 + $0x30] sm:$0xff]
      %v518 = vld [vmem:[#allocation4 + $0x38] sm:$0xff]
      %v519 = vadd.f32 %v511, %v439
      %v520 = vadd.f32 %v512, %v440
      %v521 = vadd.f32 %v513, %v441
      %v522 = vadd.f32 %v514, %v442
      %v523 = vadd.f32 %v515, %v443
      %v524 = vadd.f32 %v516, %v444
      %v525 = vadd.f32 %v517, %v445
      %v526 = vadd.f32 %v518, %v446
      %527 = vst [vmem:[#allocation4] sm:$0xff] %v519
      %528 = vst [vmem:[#allocation4 + $0x8] sm:$0xff] %v520
      %529 = vst [vmem:[#allocation4 + $0x10] sm:$0xff] %v521
      %530 = vst [vmem:[#allocation4 + $0x18] sm:$0xff] %v522
      %531 = vst [vmem:[#allocation4 + $0x20] sm:$0xff] %v523
      %532 = vst [vmem:[#allocation4 + $0x28] sm:$0xff] %v524
      %533 = vst [vmem:[#allocation4 + $0x30] sm:$0xff] %v525
      %534 = vst [vmem:[#allocation4 + $0x38] sm:$0xff] %v526
      %v543 = vcombine.high %v301, %v301
      %v544 = vcombine.high %v302, %v302
      %v545 = vcombine.high %v303, %v303
      %v546 = vcombine.high %v304, %v304
      %v547 = vcombine.high %v305, %v305
      %v548 = vcombine.high %v306, %v306
      %v549 = vcombine.high %v307, %v307
      %v550 = vcombine.high %v308, %v308
      %vm559 = vcmask 1043456
      %v560 = vsel %vm559, %v301, -inf
      %v561 = vrot.slane %v560, 4
      %v562 = vmax.f32 %v560, %v561
      %v563 = vrot.slane %v562, 2
      %v564 = vmax.f32 %v562, %v563
      %v565 = vrot.slane %v564, 1
      %v566 = vmax.f32 %v564, %v565
      %v567 = vsel %vm559, %v543, -inf
      %v568 = vrot.slane %v567, 4
      %v569 = vmax.f32 %v567, %v568
      %v570 = vrot.slane %v569, 2
      %v571 = vmax.f32 %v569, %v570
      %v572 = vrot.slane %v571, 1
      %v573 = vmax.f32 %v571, %v572
      %v574 = vsel %vm559, %v302, -inf
      %v575 = vrot.slane %v574, 4
      %v576 = vmax.f32 %v574, %v575
      %v577 = vrot.slane %v576, 2
      %v578 = vmax.f32 %v576, %v577
      %v579 = vrot.slane %v578, 1
      %v580 = vmax.f32 %v578, %v579
      %v581 = vsel %vm559, %v544, -inf
      %v582 = vrot.slane %v581, 4
      %v583 = vmax.f32 %v581, %v582
      %v584 = vrot.slane %v583, 2
      %v585 = vmax.f32 %v583, %v584
      %v586 = vrot.slane %v585, 1
      %v587 = vmax.f32 %v585, %v586
      %v588 = vsel %vm559, %v303, -inf
      %v589 = vrot.slane %v588, 4
      %v590 = vmax.f32 %v588, %v589
      %v591 = vrot.slane %v590, 2
      %v592 = vmax.f32 %v590, %v591
      %v593 = vrot.slane %v592, 1
      %v594 = vmax.f32 %v592, %v593
      %v595 = vsel %vm559, %v545, -inf
      %v596 = vrot.slane %v595, 4
      %v597 = vmax.f32 %v595, %v596
      %v598 = vrot.slane %v597, 2
      %v599 = vmax.f32 %v597, %v598
      %v600 = vrot.slane %v599, 1
      %v601 = vmax.f32 %v599, %v600
      %v602 = vsel %vm559, %v304, -inf
      %v603 = vrot.slane %v602, 4
      %v604 = vmax.f32 %v602, %v603
      %v605 = vrot.slane %v604, 2
      %v606 = vmax.f32 %v604, %v605
      %v607 = vrot.slane %v606, 1
      %v608 = vmax.f32 %v606, %v607
      %v609 = vsel %vm559, %v546, -inf
      %v610 = vrot.slane %v609, 4
      %v611 = vmax.f32 %v609, %v610
      %v612 = vrot.slane %v611, 2
      %v613 = vmax.f32 %v611, %v612
      %v614 = vrot.slane %v613, 1
      %v615 = vmax.f32 %v613, %v614
      %v616 = vsel %vm559, %v305, -inf
      %v617 = vrot.slane %v616, 4
      %v618 = vmax.f32 %v616, %v617
      %v619 = vrot.slane %v618, 2
      %v620 = vmax.f32 %v618, %v619
      %v621 = vrot.slane %v620, 1
      %v622 = vmax.f32 %v620, %v621
      %v623 = vsel %vm559, %v547, -inf
      %v624 = vrot.slane %v623, 4
      %v625 = vmax.f32 %v623, %v624
      %v626 = vrot.slane %v625, 2
      %v627 = vmax.f32 %v625, %v626
      %v628 = vrot.slane %v627, 1
      %v629 = vmax.f32 %v627, %v628
      %v630 = vsel %vm559, %v306, -inf
      %v631 = vrot.slane %v630, 4
      %v632 = vmax.f32 %v630, %v631
      %v633 = vrot.slane %v632, 2
      %v634 = vmax.f32 %v632, %v633
      %v635 = vrot.slane %v634, 1
      %v636 = vmax.f32 %v634, %v635
      %v637 = vsel %vm559, %v548, -inf
      %v638 = vrot.slane %v637, 4
      %v639 = vmax.f32 %v637, %v638
      %v640 = vrot.slane %v639, 2
      %v641 = vmax.f32 %v639, %v640
      %v642 = vrot.slane %v641, 1
      %v643 = vmax.f32 %v641, %v642
      %v644 = vsel %vm559, %v307, -inf
      %v645 = vrot.slane %v644, 4
      %v646 = vmax.f32 %v644, %v645
      %v647 = vrot.slane %v646, 2
      %v648 = vmax.f32 %v646, %v647
      %v649 = vrot.slane %v648, 1
      %v650 = vmax.f32 %v648, %v649
      %v651 = vsel %vm559, %v549, -inf
      %v652 = vrot.slane %v651, 4
      %v653 = vmax.f32 %v651, %v652
      %v654 = vrot.slane %v653, 2
      %v655 = vmax.f32 %v653, %v654
      %v656 = vrot.slane %v655, 1
      %v657 = vmax.f32 %v655, %v656
      %v658 = vsel %vm559, %v308, -inf
      %v659 = vrot.slane %v658, 4
      %v660 = vmax.f32 %v658, %v659
      %v661 = vrot.slane %v660, 2
      %v662 = vmax.f32 %v660, %v661
      %v663 = vrot.slane %v662, 1
      %v664 = vmax.f32 %v662, %v663
      %v665 = vsel %vm559, %v550, -inf
      %v666 = vrot.slane %v665, 4
      %v667 = vmax.f32 %v665, %v666
      %v668 = vrot.slane %v667, 2
      %v669 = vmax.f32 %v667, %v668
      %v670 = vrot.slane %v669, 1
      %v671 = vmax.f32 %v669, %v670
      %v688 = vcombine.low %v566, %v573
      %v689 = vcombine.low %v580, %v587
      %v690 = vcombine.low %v594, %v601
      %v691 = vcombine.low %v608, %v615
      %v692 = vcombine.low %v622, %v629
      %v693 = vcombine.low %v636, %v643
      %v694 = vcombine.low %v650, %v657
      %v695 = vcombine.low %v664, %v671
      %v704 = vsub.f32 %v301, %v688
      %v705 = vsub.f32 %v302, %v689
      %v706 = vsub.f32 %v303, %v690
      %v707 = vsub.f32 %v304, %v691
      %v708 = vsub.f32 %v305, %v692
      %v709 = vsub.f32 %v306, %v693
      %v710 = vsub.f32 %v307, %v694
      %v711 = vsub.f32 %v308, %v695
      %v712 = vmul.f32 %v704, 1.442695
      %v713 = vpow.pop %v712
      %v714 = vmul.f32 %v705, 1.442695
      %v715 = vpow.pop %v714
      %v716 = vmul.f32 %v706, 1.442695
      %v717 = vpow.pop %v716
      %v718 = vmul.f32 %v707, 1.442695
      %v719 = vpow.pop %v718
      %v720 = vmul.f32 %v708, 1.442695
      %v721 = vpow.pop %v720
      %v722 = vmul.f32 %v709, 1.442695
      %v723 = vpow.pop %v722
      %v724 = vmul.f32 %v710, 1.442695
      %v725 = vpow.pop %v724
      %v726 = vmul.f32 %v711, 1.442695
      %v727 = vpow.pop %v726
      %v736 = vcombine.high %v713, %v713
      %v737 = vcombine.high %v715, %v715
      %v738 = vcombine.high %v717, %v717
      %v739 = vcombine.high %v719, %v719
      %v740 = vcombine.high %v721, %v721
      %v741 = vcombine.high %v723, %v723
      %v742 = vcombine.high %v725, %v725
      %v743 = vcombine.high %v727, %v727
      %v752 = vsel %vm559, %v713, 0.0
      %v753 = vrot.slane %v752, 4
      %v754 = vadd.f32 %v752, %v753
      %v755 = vrot.slane %v754, 2
      %v756 = vadd.f32 %v754, %v755
      %v757 = vrot.slane %v756, 1
      %v758 = vadd.f32 %v756, %v757
      %v759 = vsel %vm559, %v736, 0.0
      %v760 = vrot.slane %v759, 4
      %v761 = vadd.f32 %v759, %v760
      %v762 = vrot.slane %v761, 2
      %v763 = vadd.f32 %v761, %v762
      %v764 = vrot.slane %v763, 1
      %v765 = vadd.f32 %v763, %v764
      %v766 = vsel %vm559, %v715, 0.0
      %v767 = vrot.slane %v766, 4
      %v768 = vadd.f32 %v766, %v767
      %v769 = vrot.slane %v768, 2
      %v770 = vadd.f32 %v768, %v769
      %v771 = vrot.slane %v770, 1
      %v772 = vadd.f32 %v770, %v771
      %v773 = vsel %vm559, %v737, 0.0
      %v774 = vrot.slane %v773, 4
      %v775 = vadd.f32 %v773, %v774
      %v776 = vrot.slane %v775, 2
      %v777 = vadd.f32 %v775, %v776
      %v778 = vrot.slane %v777, 1
      %v779 = vadd.f32 %v777, %v778
      %v780 = vsel %vm559, %v717, 0.0
      %v781 = vrot.slane %v780, 4
      %v782 = vadd.f32 %v780, %v781
      %v783 = vrot.slane %v782, 2
      %v784 = vadd.f32 %v782, %v783
      %v785 = vrot.slane %v784, 1
      %v786 = vadd.f32 %v784, %v785
      %v787 = vsel %vm559, %v738, 0.0
      %v788 = vrot.slane %v787, 4
      %v789 = vadd.f32 %v787, %v788
      %v790 = vrot.slane %v789, 2
      %v791 = vadd.f32 %v789, %v790
      %v792 = vrot.slane %v791, 1
      %v793 = vadd.f32 %v791, %v792
      %v794 = vsel %vm559, %v719, 0.0
      %v795 = vrot.slane %v794, 4
      %v796 = vadd.f32 %v794, %v795
      %v797 = vrot.slane %v796, 2
      %v798 = vadd.f32 %v796, %v797
      %v799 = vrot.slane %v798, 1
      %v800 = vadd.f32 %v798, %v799
      %v801 = vsel %vm559, %v739, 0.0
      %v802 = vrot.slane %v801, 4
      %v803 = vadd.f32 %v801, %v802
      %v804 = vrot.slane %v803, 2
      %v805 = vadd.f32 %v803, %v804
      %v806 = vrot.slane %v805, 1
      %v807 = vadd.f32 %v805, %v806
      %v808 = vsel %vm559, %v721, 0.0
      %v809 = vrot.slane %v808, 4
      %v810 = vadd.f32 %v808, %v809
      %v811 = vrot.slane %v810, 2
      %v812 = vadd.f32 %v810, %v811
      %v813 = vrot.slane %v812, 1
      %v814 = vadd.f32 %v812, %v813
      %v815 = vsel %vm559, %v740, 0.0
      %v816 = vrot.slane %v815, 4
      %v817 = vadd.f32 %v815, %v816
      %v818 = vrot.slane %v817, 2
      %v819 = vadd.f32 %v817, %v818
      %v820 = vrot.slane %v819, 1
      %v821 = vadd.f32 %v819, %v820
      %v822 = vsel %vm559, %v723, 0.0
      %v823 = vrot.slane %v822, 4
      %v824 = vadd.f32 %v822, %v823
      %v825 = vrot.slane %v824, 2
      %v826 = vadd.f32 %v824, %v825
      %v827 = vrot.slane %v826, 1
      %v828 = vadd.f32 %v826, %v827
      %v829 = vsel %vm559, %v741, 0.0
      %v830 = vrot.slane %v829, 4
      %v831 = vadd.f32 %v829, %v830
      %v832 = vrot.slane %v831, 2
      %v833 = vadd.f32 %v831, %v832
      %v834 = vrot.slane %v833, 1
      %v835 = vadd.f32 %v833, %v834
      %v836 = vsel %vm559, %v725, 0.0
      %v837 = vrot.slane %v836, 4
      %v838 = vadd.f32 %v836, %v837
      %v839 = vrot.slane %v838, 2
      %v840 = vadd.f32 %v838, %v839
      %v841 = vrot.slane %v840, 1
      %v842 = vadd.f32 %v840, %v841
      %v843 = vsel %vm559, %v742, 0.0
      %v844 = vrot.slane %v843, 4
      %v845 = vadd.f32 %v843, %v844
      %v846 = vrot.slane %v845, 2
      %v847 = vadd.f32 %v845, %v846
      %v848 = vrot.slane %v847, 1
      %v849 = vadd.f32 %v847, %v848
      %v850 = vsel %vm559, %v727, 0.0
      %v851 = vrot.slane %v850, 4
      %v852 = vadd.f32 %v850, %v851
      %v853 = vrot.slane %v852, 2
      %v854 = vadd.f32 %v852, %v853
      %v855 = vrot.slane %v854, 1
      %v856 = vadd.f32 %v854, %v855
      %v857 = vsel %vm559, %v743, 0.0
      %v858 = vrot.slane %v857, 4
      %v859 = vadd.f32 %v857, %v858
      %v860 = vrot.slane %v859, 2
      %v861 = vadd.f32 %v859, %v860
      %v862 = vrot.slane %v861, 1
      %v863 = vadd.f32 %v861, %v862
      %v864 = vlog2.pop %v758
      %v865 = vmul.f32 %v864, 0.6931472
      %v866 = vlog2.pop %v765
      %v867 = vmul.f32 %v866, 0.6931472
      %v868 = vlog2.pop %v772
      %v869 = vmul.f32 %v868, 0.6931472
      %v870 = vlog2.pop %v779
      %v871 = vmul.f32 %v870, 0.6931472
      %v872 = vlog2.pop %v786
      %v873 = vmul.f32 %v872, 0.6931472
      %v874 = vlog2.pop %v793
      %v875 = vmul.f32 %v874, 0.6931472
      %v876 = vlog2.pop %v800
      %v877 = vmul.f32 %v876, 0.6931472
      %v878 = vlog2.pop %v807
      %v879 = vmul.f32 %v878, 0.6931472
      %v880 = vlog2.pop %v814
      %v881 = vmul.f32 %v880, 0.6931472
      %v882 = vlog2.pop %v821
      %v883 = vmul.f32 %v882, 0.6931472
      %v884 = vlog2.pop %v828
      %v885 = vmul.f32 %v884, 0.6931472
      %v886 = vlog2.pop %v835
      %v887 = vmul.f32 %v886, 0.6931472
      %v888 = vlog2.pop %v842
      %v889 = vmul.f32 %v888, 0.6931472
      %v890 = vlog2.pop %v849
      %v891 = vmul.f32 %v890, 0.6931472
      %v892 = vlog2.pop %v856
      %v893 = vmul.f32 %v892, 0.6931472
      %v894 = vlog2.pop %v863
      %v895 = vmul.f32 %v894, 0.6931472
      %v896 = vadd.f32 %v566, %v865
      %v897 = vadd.f32 %v573, %v867
      %v898 = vadd.f32 %v580, %v869
      %v899 = vadd.f32 %v587, %v871
      %v900 = vadd.f32 %v594, %v873
      %v901 = vadd.f32 %v601, %v875
      %v902 = vadd.f32 %v608, %v877
      %v903 = vadd.f32 %v615, %v879
      %v904 = vadd.f32 %v622, %v881
      %v905 = vadd.f32 %v629, %v883
      %v906 = vadd.f32 %v636, %v885
      %v907 = vadd.f32 %v643, %v887
      %v908 = vadd.f32 %v650, %v889
      %v909 = vadd.f32 %v657, %v891
      %v910 = vadd.f32 %v664, %v893
      %v911 = vadd.f32 %v671, %v895
      %v920 = vcombine.high %v455, %v455
      %v921 = vcombine.high %v456, %v456
      %v922 = vcombine.high %v457, %v457
      %v923 = vcombine.high %v458, %v458
      %v924 = vcombine.high %v459, %v459
      %v925 = vcombine.high %v460, %v460
      %v926 = vcombine.high %v461, %v461
      %v927 = vcombine.high %v462, %v462
      %v936 = vsel %vm559, %v455, 0.0
      %v937 = vrot.slane %v936, 4
      %v938 = vadd.f32 %v936, %v937
      %v939 = vrot.slane %v938, 2
      %v940 = vadd.f32 %v938, %v939
      %v941 = vrot.slane %v940, 1
      %v942 = vadd.f32 %v940, %v941
      %v943 = vsel %vm559, %v920, 0.0
      %v944 = vrot.slane %v943, 4
      %v945 = vadd.f32 %v943, %v944
      %v946 = vrot.slane %v945, 2
      %v947 = vadd.f32 %v945, %v946
      %v948 = vrot.slane %v947, 1
      %v949 = vadd.f32 %v947, %v948
      %v950 = vsel %vm559, %v456, 0.0
      %v951 = vrot.slane %v950, 4
      %v952 = vadd.f32 %v950, %v951
      %v953 = vrot.slane %v952, 2
      %v954 = vadd.f32 %v952, %v953
      %v955 = vrot.slane %v954, 1
      %v956 = vadd.f32 %v954, %v955
      %v957 = vsel %vm559, %v921, 0.0
      %v958 = vrot.slane %v957, 4
      %v959 = vadd.f32 %v957, %v958
      %v960 = vrot.slane %v959, 2
      %v961 = vadd.f32 %v959, %v960
      %v962 = vrot.slane %v961, 1
      %v963 = vadd.f32 %v961, %v962
      %v964 = vsel %vm559, %v457, 0.0
      %v965 = vrot.slane %v964, 4
      %v966 = vadd.f32 %v964, %v965
      %v967 = vrot.slane %v966, 2
      %v968 = vadd.f32 %v966, %v967
      %v969 = vrot.slane %v968, 1
      %v970 = vadd.f32 %v968, %v969
      %v971 = vsel %vm559, %v922, 0.0
      %v972 = vrot.slane %v971, 4
      %v973 = vadd.f32 %v971, %v972
      %v974 = vrot.slane %v973, 2
      %v975 = vadd.f32 %v973, %v974
      %v976 = vrot.slane %v975, 1
      %v977 = vadd.f32 %v975, %v976
      %v978 = vsel %vm559, %v458, 0.0
      %v979 = vrot.slane %v978, 4
      %v980 = vadd.f32 %v978, %v979
      %v981 = vrot.slane %v980, 2
      %v982 = vadd.f32 %v980, %v981
      %v983 = vrot.slane %v982, 1
      %v984 = vadd.f32 %v982, %v983
      %v985 = vsel %vm559, %v923, 0.0
      %v986 = vrot.slane %v985, 4
      %v987 = vadd.f32 %v985, %v986
      %v988 = vrot.slane %v987, 2
      %v989 = vadd.f32 %v987, %v988
      %v990 = vrot.slane %v989, 1
      %v991 = vadd.f32 %v989, %v990
      %v992 = vsel %vm559, %v459, 0.0
      %v993 = vrot.slane %v992, 4
      %v994 = vadd.f32 %v992, %v993
      %v995 = vrot.slane %v994, 2
      %v996 = vadd.f32 %v994, %v995
      %v997 = vrot.slane %v996, 1
      %v998 = vadd.f32 %v996, %v997
      %v999 = vsel %vm559, %v924, 0.0
      %v1000 = vrot.slane %v999, 4
      %v1001 = vadd.f32 %v999, %v1000
      %v1002 = vrot.slane %v1001, 2
      %v1003 = vadd.f32 %v1001, %v1002
      %v1004 = vrot.slane %v1003, 1
      %v1005 = vadd.f32 %v1003, %v1004
      %v1006 = vsel %vm559, %v460, 0.0
      %v1007 = vrot.slane %v1006, 4
      %v1008 = vadd.f32 %v1006, %v1007
      %v1009 = vrot.slane %v1008, 2
      %v1010 = vadd.f32 %v1008, %v1009
      %v1011 = vrot.slane %v1010, 1
      %v1012 = vadd.f32 %v1010, %v1011
      %v1013 = vsel %vm559, %v925, 0.0
      %v1014 = vrot.slane %v1013, 4
      %v1015 = vadd.f32 %v1013, %v1014
      %v1016 = vrot.slane %v1015, 2
      %v1017 = vadd.f32 %v1015, %v1016
      %v1018 = vrot.slane %v1017, 1
      %v1019 = vadd.f32 %v1017, %v1018
      %v1020 = vsel %vm559, %v461, 0.0
      %v1021 = vrot.slane %v1020, 4
      %v1022 = vadd.f32 %v1020, %v1021
      %v1023 = vrot.slane %v1022, 2
      %v1024 = vadd.f32 %v1022, %v1023
      %v1025 = vrot.slane %v1024, 1
      %v1026 = vadd.f32 %v1024, %v1025
      %v1027 = vsel %vm559, %v926, 0.0
      %v1028 = vrot.slane %v1027, 4
      %v1029 = vadd.f32 %v1027, %v1028
      %v1030 = vrot.slane %v1029, 2
      %v1031 = vadd.f32 %v1029, %v1030
      %v1032 = vrot.slane %v1031, 1
      %v1033 = vadd.f32 %v1031, %v1032
      %v1034 = vsel %vm559, %v462, 0.0
      %v1035 = vrot.slane %v1034, 4
      %v1036 = vadd.f32 %v1034, %v1035
      %v1037 = vrot.slane %v1036, 2
      %v1038 = vadd.f32 %v1036, %v1037
      %v1039 = vrot.slane %v1038, 1
      %v1040 = vadd.f32 %v1038, %v1039
      %v1041 = vsel %vm559, %v927, 0.0
      %v1042 = vrot.slane %v1041, 4
      %v1043 = vadd.f32 %v1041, %v1042
      %v1044 = vrot.slane %v1043, 2
      %v1045 = vadd.f32 %v1043, %v1044
      %v1046 = vrot.slane %v1045, 1
      %v1047 = vadd.f32 %v1045, %v1046
      %1049 = vset.pattern.permute.xlu0 0
      %1050 = vperm.xlu0 %1049, %v298
      %v1051 = vpop.permute.xlu0 %1050
      %v1053 = vmul.f32 %v1051, %v407
      %v1054 = vmul.f32 %v1051, %v408
      %v1055 = vmul.f32 %v1051, %v409
      %v1056 = vmul.f32 %v1051, %v410
      %v1057 = vmul.f32 %v1051, %v411
      %v1058 = vmul.f32 %v1051, %v412
      %v1059 = vmul.f32 %v1051, %v413
      %v1060 = vmul.f32 %v1051, %v414
      %v1061 = vmul.f32 %v1051, %v415
      %v1062 = vmul.f32 %v1051, %v416
      %v1063 = vmul.f32 %v1051, %v417
      %v1064 = vmul.f32 %v1051, %v418
      %v1065 = vmul.f32 %v1051, %v419
      %v1066 = vmul.f32 %v1051, %v420
      %v1067 = vmul.f32 %v1051, %v421
      %v1068 = vmul.f32 %v1051, %v422
      %v1069 = vsel %vm559, %v1053, 0.0
      %v1070 = vrot.slane %v1069, 4
      %v1071 = vadd.f32 %v1069, %v1070
      %v1072 = vrot.slane %v1071, 2
      %v1073 = vadd.f32 %v1071, %v1072
      %v1074 = vrot.slane %v1073, 1
      %v1075 = vadd.f32 %v1073, %v1074
      %v1076 = vsel %vm559, %v1054, 0.0
      %v1077 = vrot.slane %v1076, 4
      %v1078 = vadd.f32 %v1076, %v1077
      %v1079 = vrot.slane %v1078, 2
      %v1080 = vadd.f32 %v1078, %v1079
      %v1081 = vrot.slane %v1080, 1
      %v1082 = vadd.f32 %v1080, %v1081
      %v1083 = vsel %vm559, %v1055, 0.0
      %v1084 = vrot.slane %v1083, 4
      %v1085 = vadd.f32 %v1083, %v1084
      %v1086 = vrot.slane %v1085, 2
      %v1087 = vadd.f32 %v1085, %v1086
      %v1088 = vrot.slane %v1087, 1
      %v1089 = vadd.f32 %v1087, %v1088
      %v1090 = vsel %vm559, %v1056, 0.0
      %v1091 = vrot.slane %v1090, 4
      %v1092 = vadd.f32 %v1090, %v1091
      %v1093 = vrot.slane %v1092, 2
      %v1094 = vadd.f32 %v1092, %v1093
      %v1095 = vrot.slane %v1094, 1
      %v1096 = vadd.f32 %v1094, %v1095
      %v1097 = vsel %vm559, %v1057, 0.0
      %v1098 = vrot.slane %v1097, 4
      %v1099 = vadd.f32 %v1097, %v1098
      %v1100 = vrot.slane %v1099, 2
      %v1101 = vadd.f32 %v1099, %v1100
      %v1102 = vrot.slane %v1101, 1
      %v1103 = vadd.f32 %v1101, %v1102
      %v1104 = vsel %vm559, %v1058, 0.0
      %v1105 = vrot.slane %v1104, 4
      %v1106 = vadd.f32 %v1104, %v1105
      %v1107 = vrot.slane %v1106, 2
      %v1108 = vadd.f32 %v1106, %v1107
      %v1109 = vrot.slane %v1108, 1
      %v1110 = vadd.f32 %v1108, %v1109
      %v1111 = vsel %vm559, %v1059, 0.0
      %v1112 = vrot.slane %v1111, 4
      %v1113 = vadd.f32 %v1111, %v1112
      %v1114 = vrot.slane %v1113, 2
      %v1115 = vadd.f32 %v1113, %v1114
      %v1116 = vrot.slane %v1115, 1
      %v1117 = vadd.f32 %v1115, %v1116
      %v1118 = vsel %vm559, %v1060, 0.0
      %v1119 = vrot.slane %v1118, 4
      %v1120 = vadd.f32 %v1118, %v1119
      %v1121 = vrot.slane %v1120, 2
      %v1122 = vadd.f32 %v1120, %v1121
      %v1123 = vrot.slane %v1122, 1
      %v1124 = vadd.f32 %v1122, %v1123
      %v1125 = vsel %vm559, %v1061, 0.0
      %v1126 = vrot.slane %v1125, 4
      %v1127 = vadd.f32 %v1125, %v1126
      %v1128 = vrot.slane %v1127, 2
      %v1129 = vadd.f32 %v1127, %v1128
      %v1130 = vrot.slane %v1129, 1
      %v1131 = vadd.f32 %v1129, %v1130
      %v1132 = vsel %vm559, %v1062, 0.0
      %v1133 = vrot.slane %v1132, 4
      %v1134 = vadd.f32 %v1132, %v1133
      %v1135 = vrot.slane %v1134, 2
      %v1136 = vadd.f32 %v1134, %v1135
      %v1137 = vrot.slane %v1136, 1
      %v1138 = vadd.f32 %v1136, %v1137
      %v1139 = vsel %vm559, %v1063, 0.0
      %v1140 = vrot.slane %v1139, 4
      %v1141 = vadd.f32 %v1139, %v1140
      %v1142 = vrot.slane %v1141, 2
      %v1143 = vadd.f32 %v1141, %v1142
      %v1144 = vrot.slane %v1143, 1
      %v1145 = vadd.f32 %v1143, %v1144
      %v1146 = vsel %vm559, %v1064, 0.0
      %v1147 = vrot.slane %v1146, 4
      %v1148 = vadd.f32 %v1146, %v1147
      %v1149 = vrot.slane %v1148, 2
      %v1150 = vadd.f32 %v1148, %v1149
      %v1151 = vrot.slane %v1150, 1
      %v1152 = vadd.f32 %v1150, %v1151
      %v1153 = vsel %vm559, %v1065, 0.0
      %v1154 = vrot.slane %v1153, 4
      %v1155 = vadd.f32 %v1153, %v1154
      %v1156 = vrot.slane %v1155, 2
      %v1157 = vadd.f32 %v1155, %v1156
      %v1158 = vrot.slane %v1157, 1
      %v1159 = vadd.f32 %v1157, %v1158
      %v1160 = vsel %vm559, %v1066, 0.0
      %v1161 = vrot.slane %v1160, 4
      %v1162 = vadd.f32 %v1160, %v1161
      %v1163 = vrot.slane %v1162, 2
      %v1164 = vadd.f32 %v1162, %v1163
      %v1165 = vrot.slane %v1164, 1
      %v1166 = vadd.f32 %v1164, %v1165
      %v1167 = vsel %vm559, %v1067, 0.0
      %v1168 = vrot.slane %v1167, 4
      %v1169 = vadd.f32 %v1167, %v1168
      %v1170 = vrot.slane %v1169, 2
      %v1171 = vadd.f32 %v1169, %v1170
      %v1172 = vrot.slane %v1171, 1
      %v1173 = vadd.f32 %v1171, %v1172
      %v1174 = vsel %vm559, %v1068, 0.0
      %v1175 = vrot.slane %v1174, 4
      %v1176 = vadd.f32 %v1174, %v1175
      %v1177 = vrot.slane %v1176, 2
      %v1178 = vadd.f32 %v1176, %v1177
      %v1179 = vrot.slane %v1178, 1
      %v1180 = vadd.f32 %v1178, %v1179
      %v1181 = vld [vmem:[#allocation5] sm:$0xff]
      %v1182 = vld [vmem:[#allocation5 + $0x8] sm:$0xff]
      %v1183 = vsub.f32 %v896, %v942
      %v1184 = vsub.f32 %v897, %v949
      %v1185 = vsub.f32 %v898, %v956
      %v1186 = vsub.f32 %v899, %v963
      %v1187 = vsub.f32 %v900, %v970
      %v1188 = vsub.f32 %v901, %v977
      %v1189 = vsub.f32 %v902, %v984
      %v1190 = vsub.f32 %v903, %v991
      %v1191 = vsub.f32 %v904, %v998
      %v1192 = vsub.f32 %v905, %v1005
      %v1193 = vsub.f32 %v906, %v1012
      %v1194 = vsub.f32 %v907, %v1019
      %v1195 = vsub.f32 %v908, %v1026
      %v1196 = vsub.f32 %v909, %v1033
      %v1197 = vsub.f32 %v910, %v1040
      %v1198 = vsub.f32 %v911, %v1047
      %v1199 = vmul.f32 %v1075, %v1183
      %v1200 = vmul.f32 %v1082, %v1184
      %v1201 = vmul.f32 %v1089, %v1185
      %v1202 = vmul.f32 %v1096, %v1186
      %v1203 = vmul.f32 %v1103, %v1187
      %v1204 = vmul.f32 %v1110, %v1188
      %v1205 = vmul.f32 %v1117, %v1189
      %v1206 = vmul.f32 %v1124, %v1190
      %v1207 = vmul.f32 %v1131, %v1191
      %v1208 = vmul.f32 %v1138, %v1192
      %v1209 = vmul.f32 %v1145, %v1193
      %v1210 = vmul.f32 %v1152, %v1194
      %v1211 = vmul.f32 %v1159, %v1195
      %v1212 = vmul.f32 %v1166, %v1196
      %v1213 = vmul.f32 %v1173, %v1197
      %v1214 = vmul.f32 %v1180, %v1198
      %v1231 = vcombine.low %v1199, %v1200
      %v1232 = vcombine.low %v1201, %v1202
      %v1233 = vcombine.low %v1203, %v1204
      %v1234 = vcombine.low %v1205, %v1206
      %v1236 = vunpack.c.l.s4 1966171168
      %v1237 = vunpack.c.0.s8 %v1236
      %v1238 = vlaneseq
      %v1239 = vshrl.u32 %v1238, 7
      %v1240 = vsub.s32 %v1237, %v1239
      %v1241 = vrot.slane %v1231, %v1240
      %v1243 = vunpack.c.l.s4 1966171168
      %v1244 = vunpack.c.0.s8 %v1243
      %v1245 = vlaneseq
      %v1246 = vshrl.u32 %v1245, 7
      %v1247 = vsub.s32 %v1244, %v1246
      %v1248 = vrot.slane %v1232, %v1247
      %v1250 = vunpack.c.l.s4 1966171168
      %v1251 = vunpack.c.0.s8 %v1250
      %v1252 = vlaneseq
      %v1253 = vshrl.u32 %v1252, 7
      %v1254 = vsub.s32 %v1251, %v1253
      %v1255 = vrot.slane %v1233, %v1254
      %v1257 = vunpack.c.l.s4 1966171168
      %v1258 = vunpack.c.0.s8 %v1257
      %v1259 = vlaneseq
      %v1260 = vshrl.u32 %v1259, 7
      %v1261 = vsub.s32 %v1258, %v1260
      %v1262 = vrot.slane %v1234, %v1261
      %v1263 = vcombine.low %v1241, %v1248
      %v1264 = vcombine.low %v1255, %v1262
      %v1266 = vunpack.c.l.s4 1966171168
      %v1267 = vunpack.c.0.s8 %v1266
      %v1268 = vlaneseq
      %v1269 = vshrl.u32 %v1268, 7
      %v1270 = vsub.s32 %v1267, %v1269
      %v1271 = vrot.slane %v1263, %v1270
      %v1273 = vunpack.c.l.s4 1966171168
      %v1274 = vunpack.c.0.s8 %v1273
      %v1275 = vlaneseq
      %v1276 = vshrl.u32 %v1275, 7
      %v1277 = vsub.s32 %v1274, %v1276
      %v1278 = vrot.slane %v1264, %v1277
      %v1279 = vcombine.low %v1271, %v1278
      %v1280 = vcombine.low %v1207, %v1208
      %v1281 = vcombine.low %v1209, %v1210
      %v1282 = vcombine.low %v1211, %v1212
      %v1283 = vcombine.low %v1213, %v1214
      %v1285 = vunpack.c.l.s4 1966171168
      %v1286 = vunpack.c.0.s8 %v1285
      %v1287 = vlaneseq
      %v1288 = vshrl.u32 %v1287, 7
      %v1289 = vsub.s32 %v1286, %v1288
      %v1290 = vrot.slane %v1280, %v1289
      %v1292 = vunpack.c.l.s4 1966171168
      %v1293 = vunpack.c.0.s8 %v1292
      %v1294 = vlaneseq
      %v1295 = vshrl.u32 %v1294, 7
      %v1296 = vsub.s32 %v1293, %v1295
      %v1297 = vrot.slane %v1281, %v1296
      %v1299 = vunpack.c.l.s4 1966171168
      %v1300 = vunpack.c.0.s8 %v1299
      %v1301 = vlaneseq
      %v1302 = vshrl.u32 %v1301, 7
      %v1303 = vsub.s32 %v1300, %v1302
      %v1304 = vrot.slane %v1282, %v1303
      %v1306 = vunpack.c.l.s4 1966171168
      %v1307 = vunpack.c.0.s8 %v1306
      %v1308 = vlaneseq
      %v1309 = vshrl.u32 %v1308, 7
      %v1310 = vsub.s32 %v1307, %v1309
      %v1311 = vrot.slane %v1283, %v1310
      %v1312 = vcombine.low %v1290, %v1297
      %v1313 = vcombine.low %v1304, %v1311
      %v1315 = vunpack.c.l.s4 1966171168
      %v1316 = vunpack.c.0.s8 %v1315
      %v1317 = vlaneseq
      %v1318 = vshrl.u32 %v1317, 7
      %v1319 = vsub.s32 %v1316, %v1318
      %v1320 = vrot.slane %v1312, %v1319
      %v1322 = vunpack.c.l.s4 1966171168
      %v1323 = vunpack.c.0.s8 %v1322
      %v1324 = vlaneseq
      %v1325 = vshrl.u32 %v1324, 7
      %v1326 = vsub.s32 %v1323, %v1325
      %v1327 = vrot.slane %v1313, %v1326
      %v1328 = vcombine.low %v1320, %v1327
      %v1331 = vadd.f32 %v1181, %v1279
      %v1332 = vadd.f32 %v1182, %v1328
      %1333 = vst [vmem:[#allocation5] sm:$0xff] %v1331
      %1334 = vst [vmem:[#allocation5 + $0x8] sm:$0xff] %v1332
      %v1335 = vld [vmem:[#allocation6] sm:$0xff]
      %v1336 = vld [vmem:[#allocation6 + $0x8] sm:$0xff]
      %v1353 = vcombine.low %v1075, %v1082
      %v1354 = vcombine.low %v1089, %v1096
      %v1355 = vcombine.low %v1103, %v1110
      %v1356 = vcombine.low %v1117, %v1124
      %v1358 = vunpack.c.l.s4 1966171168
      %v1359 = vunpack.c.0.s8 %v1358
      %v1360 = vlaneseq
      %v1361 = vshrl.u32 %v1360, 7
      %v1362 = vsub.s32 %v1359, %v1361
      %v1363 = vrot.slane %v1353, %v1362
      %v1365 = vunpack.c.l.s4 1966171168
      %v1366 = vunpack.c.0.s8 %v1365
      %v1367 = vlaneseq
      %v1368 = vshrl.u32 %v1367, 7
      %v1369 = vsub.s32 %v1366, %v1368
      %v1370 = vrot.slane %v1354, %v1369
      %v1372 = vunpack.c.l.s4 1966171168
      %v1373 = vunpack.c.0.s8 %v1372
      %v1374 = vlaneseq
      %v1375 = vshrl.u32 %v1374, 7
      %v1376 = vsub.s32 %v1373, %v1375
      %v1377 = vrot.slane %v1355, %v1376
      %v1379 = vunpack.c.l.s4 1966171168
      %v1380 = vunpack.c.0.s8 %v1379
      %v1381 = vlaneseq
      %v1382 = vshrl.u32 %v1381, 7
      %v1383 = vsub.s32 %v1380, %v1382
      %v1384 = vrot.slane %v1356, %v1383
      %v1385 = vcombine.low %v1363, %v1370
      %v1386 = vcombine.low %v1377, %v1384
      %v1388 = vunpack.c.l.s4 1966171168
      %v1389 = vunpack.c.0.s8 %v1388
      %v1390 = vlaneseq
      %v1391 = vshrl.u32 %v1390, 7
      %v1392 = vsub.s32 %v1389, %v1391
      %v1393 = vrot.slane %v1385, %v1392
      %v1395 = vunpack.c.l.s4 1966171168
      %v1396 = vunpack.c.0.s8 %v1395
      %v1397 = vlaneseq
      %v1398 = vshrl.u32 %v1397, 7
      %v1399 = vsub.s32 %v1396, %v1398
      %v1400 = vrot.slane %v1386, %v1399
      %v1401 = vcombine.low %v1393, %v1400
      %v1402 = vcombine.low %v1131, %v1138
      %v1403 = vcombine.low %v1145, %v1152
      %v1404 = vcombine.low %v1159, %v1166
      %v1405 = vcombine.low %v1173, %v1180
      %v1407 = vunpack.c.l.s4 1966171168
      %v1408 = vunpack.c.0.s8 %v1407
      %v1409 = vlaneseq
      %v1410 = vshrl.u32 %v1409, 7
      %v1411 = vsub.s32 %v1408, %v1410
      %v1412 = vrot.slane %v1402, %v1411
      %v1414 = vunpack.c.l.s4 1966171168
      %v1415 = vunpack.c.0.s8 %v1414
      %v1416 = vlaneseq
      %v1417 = vshrl.u32 %v1416, 7
      %v1418 = vsub.s32 %v1415, %v1417
      %v1419 = vrot.slane %v1403, %v1418
      %v1421 = vunpack.c.l.s4 1966171168
      %v1422 = vunpack.c.0.s8 %v1421
      %v1423 = vlaneseq
      %v1424 = vshrl.u32 %v1423, 7
      %v1425 = vsub.s32 %v1422, %v1424
      %v1426 = vrot.slane %v1404, %v1425
      %v1428 = vunpack.c.l.s4 1966171168
      %v1429 = vunpack.c.0.s8 %v1428
      %v1430 = vlaneseq
      %v1431 = vshrl.u32 %v1430, 7
      %v1432 = vsub.s32 %v1429, %v1431
      %v1433 = vrot.slane %v1405, %v1432
      %v1434 = vcombine.low %v1412, %v1419
      %v1435 = vcombine.low %v1426, %v1433
      %v1437 = vunpack.c.l.s4 1966171168
      %v1438 = vunpack.c.0.s8 %v1437
      %v1439 = vlaneseq
      %v1440 = vshrl.u32 %v1439, 7
      %v1441 = vsub.s32 %v1438, %v1440
      %v1442 = vrot.slane %v1434, %v1441
      %v1444 = vunpack.c.l.s4 1966171168
      %v1445 = vunpack.c.0.s8 %v1444
      %v1446 = vlaneseq
      %v1447 = vshrl.u32 %v1446, 7
      %v1448 = vsub.s32 %v1445, %v1447
      %v1449 = vrot.slane %v1435, %v1448
      %v1450 = vcombine.low %v1442, %v1449
      %v1453 = vadd.f32 %v1335, %v1401
      %v1454 = vadd.f32 %v1336, %v1450
      %1455 = vst [vmem:[#allocation6] sm:$0xff] %v1453
      %1456 = vst [vmem:[#allocation6 + $0x8] sm:$0xff] %v1454
      // Predicated region
      $region37: #{softmax_dice_loss.1} parent=31 // pred_check
        %p1457 = pneg %p266
      $region38: #{softmax_dice_loss.1} parent=31 // pred_check_branch
        %1459 = sbr.rel (%p1457) target = $region40
      $region39: #{softmax_dice_loss.1} parent=31 // pred_region
        %v1460 = vld [vmem:[#allocation2] sm:$0xff]
        %v1461 = vld [vmem:[#allocation2 + $0x8] sm:$0xff]
        %v1462 = vld [vmem:[#allocation2 + $0x10] sm:$0xff]
        %v1463 = vld [vmem:[#allocation2 + $0x18] sm:$0xff]
        %v1464 = vld [vmem:[#allocation2 + $0x20] sm:$0xff]
        %v1465 = vld [vmem:[#allocation2 + $0x28] sm:$0xff]
        %v1466 = vld [vmem:[#allocation2 + $0x30] sm:$0xff]
        %v1467 = vld [vmem:[#allocation2 + $0x38] sm:$0xff]
        %v1476 = vcombine.high %v1460, %v1460
        %v1477 = vcombine.high %v1461, %v1461
        %v1478 = vcombine.high %v1462, %v1462
        %v1479 = vcombine.high %v1463, %v1463
        %v1480 = vcombine.high %v1464, %v1464
        %v1481 = vcombine.high %v1465, %v1465
        %v1482 = vcombine.high %v1466, %v1466
        %v1483 = vcombine.high %v1467, %v1467
        %v1492 = vsel %vm559, %v1460, 0.0
        %v1493 = vsel %vm559, %v1476, 0.0
        %v1494 = vadd.f32 %v1492, %v1493
        %v1495 = vsel %vm559, %v1461, 0.0
        %v1496 = vadd.f32 %v1494, %v1495
        %v1497 = vsel %vm559, %v1477, 0.0
        %v1498 = vadd.f32 %v1496, %v1497
        %v1499 = vsel %vm559, %v1462, 0.0
        %v1500 = vadd.f32 %v1498, %v1499
        %v1501 = vsel %vm559, %v1478, 0.0
        %v1502 = vadd.f32 %v1500, %v1501
        %v1503 = vsel %vm559, %v1463, 0.0
        %v1504 = vadd.f32 %v1502, %v1503
        %v1505 = vsel %vm559, %v1479, 0.0
        %v1506 = vadd.f32 %v1504, %v1505
        %v1507 = vsel %vm559, %v1464, 0.0
        %v1508 = vadd.f32 %v1506, %v1507
        %v1509 = vsel %vm559, %v1480, 0.0
        %v1510 = vadd.f32 %v1508, %v1509
        %v1511 = vsel %vm559, %v1465, 0.0
        %v1512 = vadd.f32 %v1510, %v1511
        %v1513 = vsel %vm559, %v1481, 0.0
        %v1514 = vadd.f32 %v1512, %v1513
        %v1515 = vsel %vm559, %v1466, 0.0
        %v1516 = vadd.f32 %v1514, %v1515
        %v1517 = vsel %vm559, %v1482, 0.0
        %v1518 = vadd.f32 %v1516, %v1517
        %v1519 = vsel %vm559, %v1467, 0.0
        %v1520 = vadd.f32 %v1518, %v1519
        %v1521 = vsel %vm559, %v1483, 0.0
        %v1522 = vadd.f32 %v1520, %v1521
        %1523 = vadd.xlane.f32.xlu0 %v1522
        %v1524 = vpop.xlane.xlu0 %1523
        %v1525 = vld [vmem:[#allocation3] sm:$0xff]
        %v1526 = vld [vmem:[#allocation3 + $0x8] sm:$0xff]
        %v1527 = vld [vmem:[#allocation3 + $0x10] sm:$0xff]
        %v1528 = vld [vmem:[#allocation3 + $0x18] sm:$0xff]
        %v1529 = vld [vmem:[#allocation3 + $0x20] sm:$0xff]
        %v1530 = vld [vmem:[#allocation3 + $0x28] sm:$0xff]
        %v1531 = vld [vmem:[#allocation3 + $0x30] sm:$0xff]
        %v1532 = vld [vmem:[#allocation3 + $0x38] sm:$0xff]
        %v1541 = vcombine.high %v1525, %v1525
        %v1542 = vcombine.high %v1526, %v1526
        %v1543 = vcombine.high %v1527, %v1527
        %v1544 = vcombine.high %v1528, %v1528
        %v1545 = vcombine.high %v1529, %v1529
        %v1546 = vcombine.high %v1530, %v1530
        %v1547 = vcombine.high %v1531, %v1531
        %v1548 = vcombine.high %v1532, %v1532
        %v1557 = vsel %vm559, %v1525, 0.0
        %v1558 = vsel %vm559, %v1541, 0.0
        %v1559 = vadd.f32 %v1557, %v1558
        %v1560 = vsel %vm559, %v1526, 0.0
        %v1561 = vadd.f32 %v1559, %v1560
        %v1562 = vsel %vm559, %v1542, 0.0
        %v1563 = vadd.f32 %v1561, %v1562
        %v1564 = vsel %vm559, %v1527, 0.0
        %v1565 = vadd.f32 %v1563, %v1564
        %v1566 = vsel %vm559, %v1543, 0.0
        %v1567 = vadd.f32 %v1565, %v1566
        %v1568 = vsel %vm559, %v1528, 0.0
        %v1569 = vadd.f32 %v1567, %v1568
        %v1570 = vsel %vm559, %v1544, 0.0
        %v1571 = vadd.f32 %v1569, %v1570
        %v1572 = vsel %vm559, %v1529, 0.0
        %v1573 = vadd.f32 %v1571, %v1572
        %v1574 = vsel %vm559, %v1545, 0.0
        %v1575 = vadd.f32 %v1573, %v1574
        %v1576 = vsel %vm559, %v1530, 0.0
        %v1577 = vadd.f32 %v1575, %v1576
        %v1578 = vsel %vm559, %v1546, 0.0
        %v1579 = vadd.f32 %v1577, %v1578
        %v1580 = vsel %vm559, %v1531, 0.0
        %v1581 = vadd.f32 %v1579, %v1580
        %v1582 = vsel %vm559, %v1547, 0.0
        %v1583 = vadd.f32 %v1581, %v1582
        %v1584 = vsel %vm559, %v1532, 0.0
        %v1585 = vadd.f32 %v1583, %v1584
        %v1586 = vsel %vm559, %v1548, 0.0
        %v1587 = vadd.f32 %v1585, %v1586
        %1588 = vadd.xlane.f32.xlu0 %v1587
        %v1589 = vpop.xlane.xlu0 %1588
        %v1590 = vld [vmem:[#allocation4] sm:$0xff]
        %v1591 = vld [vmem:[#allocation4 + $0x8] sm:$0xff]
        %v1592 = vld [vmem:[#allocation4 + $0x10] sm:$0xff]
        %v1593 = vld [vmem:[#allocation4 + $0x18] sm:$0xff]
        %v1594 = vld [vmem:[#allocation4 + $0x20] sm:$0xff]
        %v1595 = vld [vmem:[#allocation4 + $0x28] sm:$0xff]
        %v1596 = vld [vmem:[#allocation4 + $0x30] sm:$0xff]
        %v1597 = vld [vmem:[#allocation4 + $0x38] sm:$0xff]
        %v1606 = vcombine.high %v1590, %v1590
        %v1607 = vcombine.high %v1591, %v1591
        %v1608 = vcombine.high %v1592, %v1592
        %v1609 = vcombine.high %v1593, %v1593
        %v1610 = vcombine.high %v1594, %v1594
        %v1611 = vcombine.high %v1595, %v1595
        %v1612 = vcombine.high %v1596, %v1596
        %v1613 = vcombine.high %v1597, %v1597
        %v1622 = vsel %vm559, %v1590, 0.0
        %v1623 = vsel %vm559, %v1606, 0.0
        %v1624 = vadd.f32 %v1622, %v1623
        %v1625 = vsel %vm559, %v1591, 0.0
        %v1626 = vadd.f32 %v1624, %v1625
        %v1627 = vsel %vm559, %v1607, 0.0
        %v1628 = vadd.f32 %v1626, %v1627
        %v1629 = vsel %vm559, %v1592, 0.0
        %v1630 = vadd.f32 %v1628, %v1629
        %v1631 = vsel %vm559, %v1608, 0.0
        %v1632 = vadd.f32 %v1630, %v1631
        %v1633 = vsel %vm559, %v1593, 0.0
        %v1634 = vadd.f32 %v1632, %v1633
        %v1635 = vsel %vm559, %v1609, 0.0
        %v1636 = vadd.f32 %v1634, %v1635
        %v1637 = vsel %vm559, %v1594, 0.0
        %v1638 = vadd.f32 %v1636, %v1637
        %v1639 = vsel %vm559, %v1610, 0.0
        %v1640 = vadd.f32 %v1638, %v1639
        %v1641 = vsel %vm559, %v1595, 0.0
        %v1642 = vadd.f32 %v1640, %v1641
        %v1643 = vsel %vm559, %v1611, 0.0
        %v1644 = vadd.f32 %v1642, %v1643
        %v1645 = vsel %vm559, %v1596, 0.0
        %v1646 = vadd.f32 %v1644, %v1645
        %v1647 = vsel %vm559, %v1612, 0.0
        %v1648 = vadd.f32 %v1646, %v1647
        %v1649 = vsel %vm559, %v1597, 0.0
        %v1650 = vadd.f32 %v1648, %v1649
        %v1651 = vsel %vm559, %v1613, 0.0
        %v1652 = vadd.f32 %v1650, %v1651
        %1653 = vadd.xlane.f32.xlu0 %v1652
        %v1654 = vpop.xlane.xlu0 %1653
        %v1656 = vlaneseq
        %v1657 = vand.u32 %v1656, 127
        %v1658 = vlaneseq
        %v1659 = vshrl.u32 %v1658, 7
        %v1660 = vsub.s32 %v1657, %v1659
        %v1661 = vrot.slane %v1524, %v1660
        %v1664 = vlaneseq
        %v1665 = vshrl.u32 %v1664, 7
        %v1666 = vsub.s32 %v1657, %v1665
        %v1667 = vrot.slane %v1589, %v1666
        %v1670 = vlaneseq
        %v1671 = vshrl.u32 %v1670, 7
        %v1672 = vsub.s32 %v1657, %v1671
        %v1673 = vrot.slane %v1654, %v1672
        %vm1675 = vcmask 1040384
        %v1676 = vsel %vm1675, %v1661, %v1667
        %vm1677 = vcmask 1041408
        %v1678 = vsel %vm1677, %v1676, %v1673
        %vm1679 = vcmask 26624
        %1680 = vst.msk [vmem:[%s262] sm:$0x7] %vm1679, %v1678
        %v1681 = vld [vmem:[#allocation5] sm:$0xff]
        %v1682 = vld [vmem:[#allocation5 + $0x8] sm:$0xff]
        %v1685 = vlaneseq
        %v1686 = vshrl.u32 %v1685, 7
        %v1687 = vsub.s32 0, %v1686
        %v1688 = vrot.slane %v1681, %v1687
        %v1689 = vlaneseq
        %v1690 = vshrl.u32 %v1689, 7
        %v1691 = vsub.s32 1, %v1690
        %v1692 = vrot.slane %v1681, %v1691
        %v1693 = vlaneseq
        %v1694 = vshrl.u32 %v1693, 7
        %v1695 = vsub.s32 2, %v1694
        %v1696 = vrot.slane %v1681, %v1695
        %v1697 = vlaneseq
        %v1698 = vshrl.u32 %v1697, 7
        %v1699 = vsub.s32 3, %v1698
        %v1700 = vrot.slane %v1681, %v1699
        %v1701 = vlaneseq
        %v1702 = vshrl.u32 %v1701, 7
        %v1703 = vsub.s32 4, %v1702
        %v1704 = vrot.slane %v1681, %v1703
        %v1705 = vlaneseq
        %v1706 = vshrl.u32 %v1705, 7
        %v1707 = vsub.s32 5, %v1706
        %v1708 = vrot.slane %v1681, %v1707
        %v1709 = vlaneseq
        %v1710 = vshrl.u32 %v1709, 7
        %v1711 = vsub.s32 6, %v1710
        %v1712 = vrot.slane %v1681, %v1711
        %v1713 = vlaneseq
        %v1714 = vshrl.u32 %v1713, 7
        %v1715 = vsub.s32 7, %v1714
        %v1716 = vrot.slane %v1681, %v1715
        %v1717 = vlaneseq
        %v1718 = vshrl.u32 %v1717, 7
        %v1719 = vsub.s32 0, %v1718
        %v1720 = vrot.slane %v1682, %v1719
        %v1721 = vlaneseq
        %v1722 = vshrl.u32 %v1721, 7
        %v1723 = vsub.s32 1, %v1722
        %v1724 = vrot.slane %v1682, %v1723
        %v1725 = vlaneseq
        %v1726 = vshrl.u32 %v1725, 7
        %v1727 = vsub.s32 2, %v1726
        %v1728 = vrot.slane %v1682, %v1727
        %v1729 = vlaneseq
        %v1730 = vshrl.u32 %v1729, 7
        %v1731 = vsub.s32 3, %v1730
        %v1732 = vrot.slane %v1682, %v1731
        %v1733 = vlaneseq
        %v1734 = vshrl.u32 %v1733, 7
        %v1735 = vsub.s32 4, %v1734
        %v1736 = vrot.slane %v1682, %v1735
        %v1737 = vlaneseq
        %v1738 = vshrl.u32 %v1737, 7
        %v1739 = vsub.s32 5, %v1738
        %v1740 = vrot.slane %v1682, %v1739
        %v1741 = vlaneseq
        %v1742 = vshrl.u32 %v1741, 7
        %v1743 = vsub.s32 6, %v1742
        %v1744 = vrot.slane %v1682, %v1743
        %v1745 = vlaneseq
        %v1746 = vshrl.u32 %v1745, 7
        %v1747 = vsub.s32 7, %v1746
        %v1748 = vrot.slane %v1682, %v1747
        %v1765 = vsel %vm1675, %v1688, 0.0
        %v1766 = vsel %vm1675, %v1692, 0.0
        %v1767 = vadd.f32 %v1765, %v1766
        %v1768 = vsel %vm1675, %v1696, 0.0
        %v1769 = vadd.f32 %v1767, %v1768
        %v1770 = vsel %vm1675, %v1700, 0.0
        %v1771 = vadd.f32 %v1769, %v1770
        %v1772 = vsel %vm1675, %v1704, 0.0
        %v1773 = vadd.f32 %v1771, %v1772
        %v1774 = vsel %vm1675, %v1708, 0.0
        %v1775 = vadd.f32 %v1773, %v1774
        %v1776 = vsel %vm1675, %v1712, 0.0
        %v1777 = vadd.f32 %v1775, %v1776
        %v1778 = vsel %vm1675, %v1716, 0.0
        %v1779 = vadd.f32 %v1777, %v1778
        %v1780 = vsel %vm1675, %v1720, 0.0
        %v1781 = vadd.f32 %v1779, %v1780
        %v1782 = vsel %vm1675, %v1724, 0.0
        %v1783 = vadd.f32 %v1781, %v1782
        %v1784 = vsel %vm1675, %v1728, 0.0
        %v1785 = vadd.f32 %v1783, %v1784
        %v1786 = vsel %vm1675, %v1732, 0.0
        %v1787 = vadd.f32 %v1785, %v1786
        %v1788 = vsel %vm1675, %v1736, 0.0
        %v1789 = vadd.f32 %v1787, %v1788
        %v1790 = vsel %vm1675, %v1740, 0.0
        %v1791 = vadd.f32 %v1789, %v1790
        %v1792 = vsel %vm1675, %v1744, 0.0
        %v1793 = vadd.f32 %v1791, %v1792
        %v1794 = vsel %vm1675, %v1748, 0.0
        %v1795 = vadd.f32 %v1793, %v1794
        %1796 = vadd.xlane.f32.xlu0 %v1795
        %v1797 = vpop.xlane.xlu0 %1796
        %v1798 = vld [vmem:[#allocation6] sm:$0xff]
        %v1799 = vld [vmem:[#allocation6 + $0x8] sm:$0xff]
        %v1802 = vlaneseq
        %v1803 = vshrl.u32 %v1802, 7
        %v1804 = vsub.s32 0, %v1803
        %v1805 = vrot.slane %v1798, %v1804
        %v1806 = vlaneseq
        %v1807 = vshrl.u32 %v1806, 7
        %v1808 = vsub.s32 1, %v1807
        %v1809 = vrot.slane %v1798, %v1808
        %v1810 = vlaneseq
        %v1811 = vshrl.u32 %v1810, 7
        %v1812 = vsub.s32 2, %v1811
        %v1813 = vrot.slane %v1798, %v1812
        %v1814 = vlaneseq
        %v1815 = vshrl.u32 %v1814, 7
        %v1816 = vsub.s32 3, %v1815
        %v1817 = vrot.slane %v1798, %v1816
        %v1818 = vlaneseq
        %v1819 = vshrl.u32 %v1818, 7
        %v1820 = vsub.s32 4, %v1819
        %v1821 = vrot.slane %v1798, %v1820
        %v1822 = vlaneseq
        %v1823 = vshrl.u32 %v1822, 7
        %v1824 = vsub.s32 5, %v1823
        %v1825 = vrot.slane %v1798, %v1824
        %v1826 = vlaneseq
        %v1827 = vshrl.u32 %v1826, 7
        %v1828 = vsub.s32 6, %v1827
        %v1829 = vrot.slane %v1798, %v1828
        %v1830 = vlaneseq
        %v1831 = vshrl.u32 %v1830, 7
        %v1832 = vsub.s32 7, %v1831
        %v1833 = vrot.slane %v1798, %v1832
        %v1834 = vlaneseq
        %v1835 = vshrl.u32 %v1834, 7
        %v1836 = vsub.s32 0, %v1835
        %v1837 = vrot.slane %v1799, %v1836
        %v1838 = vlaneseq
        %v1839 = vshrl.u32 %v1838, 7
        %v1840 = vsub.s32 1, %v1839
        %v1841 = vrot.slane %v1799, %v1840
        %v1842 = vlaneseq
        %v1843 = vshrl.u32 %v1842, 7
        %v1844 = vsub.s32 2, %v1843
        %v1845 = vrot.slane %v1799, %v1844
        %v1846 = vlaneseq
        %v1847 = vshrl.u32 %v1846, 7
        %v1848 = vsub.s32 3, %v1847
        %v1849 = vrot.slane %v1799, %v1848
        %v1850 = vlaneseq
        %v1851 = vshrl.u32 %v1850, 7
        %v1852 = vsub.s32 4, %v1851
        %v1853 = vrot.slane %v1799, %v1852
        %v1854 = vlaneseq
        %v1855 = vshrl.u32 %v1854, 7
        %v1856 = vsub.s32 5, %v1855
        %v1857 = vrot.slane %v1799, %v1856
        %v1858 = vlaneseq
        %v1859 = vshrl.u32 %v1858, 7
        %v1860 = vsub.s32 6, %v1859
        %v1861 = vrot.slane %v1799, %v1860
        %v1862 = vlaneseq
        %v1863 = vshrl.u32 %v1862, 7
        %v1864 = vsub.s32 7, %v1863
        %v1865 = vrot.slane %v1799, %v1864
        %v1882 = vsel %vm1675, %v1805, 0.0
        %v1883 = vsel %vm1675, %v1809, 0.0
        %v1884 = vadd.f32 %v1882, %v1883
        %v1885 = vsel %vm1675, %v1813, 0.0
        %v1886 = vadd.f32 %v1884, %v1885
        %v1887 = vsel %vm1675, %v1817, 0.0
        %v1888 = vadd.f32 %v1886, %v1887
        %v1889 = vsel %vm1675, %v1821, 0.0
        %v1890 = vadd.f32 %v1888, %v1889
        %v1891 = vsel %vm1675, %v1825, 0.0
        %v1892 = vadd.f32 %v1890, %v1891
        %v1893 = vsel %vm1675, %v1829, 0.0
        %v1894 = vadd.f32 %v1892, %v1893
        %v1895 = vsel %vm1675, %v1833, 0.0
        %v1896 = vadd.f32 %v1894, %v1895
        %v1897 = vsel %vm1675, %v1837, 0.0
        %v1898 = vadd.f32 %v1896, %v1897
        %v1899 = vsel %vm1675, %v1841, 0.0
        %v1900 = vadd.f32 %v1898, %v1899
        %v1901 = vsel %vm1675, %v1845, 0.0
        %v1902 = vadd.f32 %v1900, %v1901
        %v1903 = vsel %vm1675, %v1849, 0.0
        %v1904 = vadd.f32 %v1902, %v1903
        %v1905 = vsel %vm1675, %v1853, 0.0
        %v1906 = vadd.f32 %v1904, %v1905
        %v1907 = vsel %vm1675, %v1857, 0.0
        %v1908 = vadd.f32 %v1906, %v1907
        %v1909 = vsel %vm1675, %v1861, 0.0
        %v1910 = vadd.f32 %v1908, %v1909
        %v1911 = vsel %vm1675, %v1865, 0.0
        %v1912 = vadd.f32 %v1910, %v1911
        %1913 = vadd.xlane.f32.xlu0 %v1912
        %v1914 = vpop.xlane.xlu0 %1913
        %vm1915 = vcmask 7168
        %v1916 = vsel %vm1915, %v1797, %v1914
        %vm1917 = vcmask 8192
        %1918 = vst.msk [vmem:[%s265] sm:$0x1] %vm1917, %v1916
      $region40: #{softmax_dice_loss.1} parent=31 // pred_fallthru
        _
      %p1919 = scmp.lt.s32.totalorder %s20, 1
      %s1920 = scalar_select %p1919, %s20, 1
      %s1921 = smul.addr %s1920, 4
      %s1922 = scalar_lea.vmem %s3, %s1921
      %p1923 = scmp.lt.s32.totalorder %s20, 1
      %s1924 = scalar_select %p1923, %s20, 1
      %s1925 = scalar_lea.vmem %s4, %s1924
      // Predicated region
      $region41: #{softmax_dice_loss.1} parent=31 // pred_check
        %p1926 = pneg %p123
      $region42: #{softmax_dice_loss.1} parent=31 // pred_check_branch
        %1928 = sbr.rel (%p1926) target = $region44
      $region43: #{softmax_dice_loss.1} parent=31 // pred_region
        _
      $region44: #{softmax_dice_loss.1} parent=31 // pred_fallthru
        _
      // Predicated region
      $region45: #{softmax_dice_loss.1} parent=31 // pred_check
        %p1929 = pneg %p149
      $region46: #{softmax_dice_loss.1} parent=31 // pred_check_branch
        %1931 = sbr.rel (%p1929) target = $region48
      $region47: #{softmax_dice_loss.1} parent=31 // pred_region
        _
      $region48: #{softmax_dice_loss.1} parent=31 // pred_fallthru
        _
    $region32: #{softmax_dice_loss.1} parent=5 // pred_fallthru
      _
    %p1932 = scmp.le.s32.totalorder 2, %s11
    // Predicated region
    $region49: #{softmax_dice_loss.1} parent=5 // pred_check
      %p1933 = pneg %p1932
    $region50: #{softmax_dice_loss.1} parent=5 // pred_check_branch
      %1935 = sbr.rel (%p1933) target = $region52
    $region51: #{softmax_dice_loss.1} parent=5 // pred_region
      %s1936 = ssub.s32 %s11, 2
      // Predicated region
      $region53: #{softmax_dice_loss.1} parent=51 // pred_check
        %p1937 = pneg %p129
      $region54: #{softmax_dice_loss.1} parent=51 // pred_check_branch
        %1939 = sbr.rel (%p1937) target = $region56
      $region55: #{softmax_dice_loss.1} parent=51 // pred_region
        %p1940 = scmp.lt.s32.totalorder %s22, 1
        %s1941 = scalar_select %p1940, %s22, 1
        %s1942 = smul.addr %s1941, 4
        %s1943 = scalar_lea.vmem %s3, %s1942
      $region56: #{softmax_dice_loss.1} parent=51 // pred_fallthru
        _
      // Predicated region
      $region57: #{softmax_dice_loss.1} parent=51 // pred_check
        %p1944 = pneg %p155
      $region58: #{softmax_dice_loss.1} parent=51 // pred_check_branch
        %1946 = sbr.rel (%p1944) target = $region60
      $region59: #{softmax_dice_loss.1} parent=51 // pred_region
        %p1947 = scmp.lt.s32.totalorder %s22, 1
        %s1948 = scalar_select %p1947, %s22, 1
        %s1949 = scalar_lea.vmem %s4, %s1948
      $region60: #{softmax_dice_loss.1} parent=51 // pred_fallthru
        _
    $region52: #{softmax_dice_loss.1} parent=5 // pred_fallthru
      _
  $region6: #{softmax_dice_loss.1} parent=0 // loop_footer
    %s15 = sadd.s32 1, %s11
  $region7: #{softmax_dice_loss.1} parent=0 // loop_footer_branch
    %10 = sbr.rel target = $region3
  $region8: #{softmax_dice_loss.1} parent=0 // loop_exit
    _

</llo_original>
